<compile_context>
chip_gen: v5e
topology: v5e:2x2
jax: 0.10.0
libtpu: 0.0.40
codegen_flags: <defaults>
</compile_context>

<pallas_src>
import jax
import jax.numpy as jnp
from jax.experimental import pallas as pl
from jax.experimental.pallas import tpu as pltpu

# ----------------- synthetic small BERT config -----------------
VOCAB = 128
TYPE_VOCAB = 2
MAX_POS = 64
HIDDEN = 32
N_LAYERS = 2
N_HEADS = 2
HEAD_DIM = HIDDEN // N_HEADS
INTERMEDIATE = 64
NUM_CLASSES = 4
LN_EPS = 1e-12

B = 2          # batch
S = 8          # sequence length (power of two -> in-kernel bit ops for pos / batch id)
T = B * S      # total tokens
C_PAD = 128    # lane-padded classifier output width (sliced back to NUM_CLASSES)
EMB_ROWS = 256 # padded one-hot width: 128 word | 64 pos | 2 type | 62 pad

assert S & (S - 1) == 0, "S must be a power of two for the bit-op batch/pos derivation"
S_SHIFT = S.bit_length() - 1

# Full-array VMEM residency (no tiling grid needed at this size).
VMEM_SPEC = pl.BlockSpec(memory_space=pltpu.MemorySpace.VMEM)


# ----------------- the fused forward kernel -----------------
def _bert_fwd_kernel(tok_ref, mask_ref,
                     emb_tab_ref, wqkv_ref, wo_ref, w1_ref, w2_ref, vecs_ref,
                     pool_w_ref, fc_w_ref,
                     out_ref, ctx_ref):
    f32 = jnp.float32
    bf16 = jnp.bfloat16

    def layernorm(x, g, b):
        mean = jnp.mean(x, axis=-1, keepdims=True)
        var = jnp.mean((x - mean) ** 2, axis=-1, keepdims=True)
        return (x - mean) * jax.lax.rsqrt(var + f32(LN_EPS)) * g + b

    # ---------- packed scalar-ish inputs ----------
    tok = tok_ref[...]                      # (T, 2) int32: [word_id | type_id]
    ids = tok[:, 0:1]                       # (T, 1)
    type_ids = tok[:, 1:2]                  # (T, 1)

    # position id per token, generated in-kernel (row index mod S; S is a power of two)
    tok_idx = jax.lax.broadcasted_iota(jnp.int32, (T, 1), 0)
    pos_ids = jnp.bitwise_and(tok_idx, S - 1)

    # ---------- embeddings: ONE fused one-hot matmul (word + pos + type) ----------
    col = jax.lax.broadcasted_iota(jnp.int32, (T, EMB_ROWS), 1)
    oh = jnp.where((col == ids)
                   | (col == pos_ids + VOCAB)
                   | (col == type_ids + (VOCAB + MAX_POS)),
                   f32(1.0), f32(0.0))
    emb = jnp.dot(oh.astype(bf16), emb_tab_ref[...],
                  preferred_element_type=f32)                       # (T, H)

    head_slab = vecs_ref[N_LAYERS]                                  # (8, 128)
    emb_g = head_slab[0:1, 0:HIDDEN]
    emb_b = head_slab[1:2, 0:HIDDEN]
    pool_b = head_slab[2:3, 0:HIDDEN]
    fc_b = head_slab[3:4, :]                                        # (1, 128) zero-padded

    x = layernorm(emb, emb_g, emb_b)
    # TODO(synk): embedding / hidden / attention dropout omitted (eval-mode identity).

    # ---------- block-diagonal additive attention mask, built once ----------
    row_idx = jax.lax.broadcasted_iota(jnp.int32, (T, T), 0)
    col_idx = jax.lax.broadcasted_iota(jnp.int32, (T, T), 1)
    same_batch = jnp.right_shift(row_idx, S_SHIFT) == jnp.right_shift(col_idx, S_SHIFT)
    key_valid = mask_ref[...] > f32(0.5)                            # (1, T), broadcasts
    add_mask = jnp.where(jnp.logical_and(same_batch, key_valid),
                         f32(0.0), f32(-10000.0))                   # (T, T)

    scale = f32(1.0 / (HEAD_DIM ** 0.5))
    gelu_c0 = f32(0.7978845608028654)   # sqrt(2/pi)
    gelu_c1 = f32(0.044715)

    # ---------- encoder layers (statically unrolled) ----------
    for l in range(N_LAYERS):
        vec = vecs_ref[l]                          # (8, 128) packed 1-D params
        bqkv = vec[0:1, 0:3 * HIDDEN]              # head-contiguous order (zeros here)
        bo = vec[1:2, 0:HIDDEN]
        ln1_g = vec[2:3, 0:HIDDEN]
        ln1_b = vec[3:4, 0:HIDDEN]
        b1 = vec[4:5, 0:INTERMEDIATE]
        b2 = vec[5:6, 0:HIDDEN]
        ln2_g = vec[6:7, 0:HIDDEN]
        ln2_b = vec[7:8, 0:HIDDEN]

        # fused, head-contiguous Q|K|V projection: one MXU pass with N = 3H
        qkv = jnp.dot(x.astype(bf16), wqkv_ref[l],
                      preferred_element_type=f32) + bqkv            # (T, 3H)

        # per-head full (T x T) attention; context written to scratch at static offsets
        for h in range(N_HEADS):
            c0 = h * 3 * HEAD_DIM
            chunk = qkv[:, c0:c0 + 3 * HEAD_DIM]                    # (T, 3*dh) contiguous
            q = chunk[:, 0:HEAD_DIM]
            k = chunk[:, HEAD_DIM:2 * HEAD_DIM]
            v = chunk[:, 2 * HEAD_DIM:3 * HEAD_DIM]

            s = jnp.einsum("qd,kd->qk", q.astype(bf16), k.astype(bf16),
                           preferred_element_type=f32) * scale + add_mask
            s = s - jnp.max(s, axis=-1, keepdims=True)
            p = jnp.exp(s)
            p = p * pl.reciprocal(jnp.sum(p, axis=-1, keepdims=True), approx=True)
            ctx_ref[:, h * HEAD_DIM:(h + 1) * HEAD_DIM] = jnp.dot(
                p.astype(bf16), v.astype(bf16), preferred_element_type=f32)

        attn_out = jnp.dot(ctx_ref[...].astype(bf16), wo_ref[l],
                           preferred_element_type=f32) + bo
        x = layernorm(x + attn_out, ln1_g, ln1_b)

        inter = jnp.dot(x.astype(bf16), w1_ref[l],
                        preferred_element_type=f32) + b1
        # tanh-approximate GELU (EUP); slight deviation from PyTorch's exact erf GELU
        inter = 0.5 * inter * (1.0 + jnp.tanh(
            gelu_c0 * (inter + gelu_c1 * inter * inter * inter)))
        ffn = jnp.dot(inter.astype(bf16), w2_ref[l],
                      preferred_element_type=f32) + b2
        x = layernorm(x + ffn, ln2_g, ln2_b)

    # ---------- pooler (tanh dense) + dropout(eval identity) + classifier fc ----------
    # Evaluated lane-dense over all T rows; the wrapper slices the CLS rows / real classes.
    pooled = jnp.tanh(jnp.dot(x.astype(bf16), pool_w_ref[...],
                              preferred_element_type=f32) + pool_b)
    out_ref[...] = jnp.dot(pooled.astype(bf16), fc_w_ref[...],
                           preferred_element_type=f32) + fc_b


# ----------------- parameter construction (packed for the fused kernel) -----------------
def init_params(key):
    def normal(k, shape, std):
        return std * jax.random.normal(k, shape, dtype=jnp.float32)

    def pad_lanes(v, width=C_PAD):
        return jnp.pad(v, (0, width - v.shape[0]))

    keys = iter(jax.random.split(key, 3 + 6 * N_LAYERS + 3))

    word_emb = normal(next(keys), (VOCAB, HIDDEN), 0.02)
    pos_emb = normal(next(keys), (MAX_POS, HIDDEN), 0.02)
    type_emb = normal(next(keys), (TYPE_VOCAB, HIDDEN), 0.02)
    emb_tab = jnp.zeros((EMB_ROWS, HIDDEN), jnp.float32)
    emb_tab = emb_tab.at[0:VOCAB].set(word_emb)
    emb_tab = emb_tab.at[VOCAB:VOCAB + MAX_POS].set(pos_emb)
    emb_tab = emb_tab.at[VOCAB + MAX_POS:VOCAB + MAX_POS + TYPE_VOCAB].set(type_emb)

    ones_h = jnp.ones((HIDDEN,), jnp.float32)
    zeros_h = jnp.zeros((HIDDEN,), jnp.float32)

    wqkv, wo, w1, w2, vecs = [], [], [], [], []
    for _ in range(N_LAYERS):
        wq = normal(next(keys), (HIDDEN, HIDDEN), 0.02)
        wk = normal(next(keys), (HIDDEN, HIDDEN), 0.02)
        wv = normal(next(keys), (HIDDEN, HIDDEN), 0.02)
        # head-contiguous packing: [Q_h | K_h | V_h] per head
        cols = []
        for h in range(N_HEADS):
            sl = slice(h * HEAD_DIM, (h + 1) * HEAD_DIM)
            cols += [wq[:, sl], wk[:, sl], wv[:, sl]]
        wqkv.append(jnp.concatenate(cols, axis=1))                   # (H, 3H)
        wo.append(normal(next(keys), (HIDDEN, HIDDEN), 0.02))
        w1.append(normal(next(keys), (HIDDEN, INTERMEDIATE), 0.02))
        w2.append(normal(next(keys), (INTERMEDIATE, HIDDEN), 0.02))
        vecs.append(jnp.stack([
            pad_lanes(jnp.zeros((3 * HIDDEN,), jnp.float32)),        # bqkv (head-contig order)
            pad_lanes(zeros_h),                                      # bo
            pad_lanes(ones_h), pad_lanes(zeros_h),                   # ln1 gamma / beta
            pad_lanes(jnp.zeros((INTERMEDIATE,), jnp.float32)),      # b1
            pad_lanes(zeros_h),                                      # b2
            pad_lanes(ones_h), pad_lanes(zeros_h),                   # ln2 gamma / beta
        ]))                                                          # (8, 128)

    pool_w = normal(next(keys), (HIDDEN, HIDDEN), 0.02)
    # classifier head: nn.init.normal_(fc.weight, std=0.2); nn.init.normal_(fc.bias) -> std=1
    fc_w = normal(next(keys), (HIDDEN, NUM_CLASSES), 0.2)
    fc_b = normal(next(keys), (NUM_CLASSES,), 1.0)

    # head slab folded into the same packed param array:
    # rows: emb-LN gamma | emb-LN beta | pooler bias | fc bias (padded) | zeros...
    head_slab = jnp.stack([
        pad_lanes(ones_h), pad_lanes(zeros_h),
        pad_lanes(zeros_h), pad_lanes(fc_b),
        jnp.zeros((C_PAD,), jnp.float32), jnp.zeros((C_PAD,), jnp.float32),
        jnp.zeros((C_PAD,), jnp.float32), jnp.zeros((C_PAD,), jnp.float32),
    ])

    bf16 = jnp.bfloat16
    return {
        "emb_tab": emb_tab.astype(bf16),                             # (256, H)
        "wqkv": jnp.stack(wqkv).astype(bf16),                        # (L, H, 3H)
        "wo": jnp.stack(wo).astype(bf16),                            # (L, H, H)
        "w1": jnp.stack(w1).astype(bf16),                            # (L, H, I)
        "w2": jnp.stack(w2).astype(bf16),                            # (L, I, H)
        "vecs": jnp.concatenate([jnp.stack(vecs), head_slab[None]],  # (L+1, 8, 128) f32
                                axis=0),
        "pool_w": pool_w.astype(bf16),                               # (H, H)
        "fc_w": jnp.pad(fc_w, ((0, 0), (0, C_PAD - NUM_CLASSES))).astype(bf16),  # (H, 128)
    }


# ----------------- cost hint for the single fused call -----------------
def _cost_estimate(inputs):
    flops = (
        2 * T * EMB_ROWS * HIDDEN
        + N_LAYERS * (
            2 * T * HIDDEN * 3 * HIDDEN                  # fused QKV
            + N_HEADS * (2 * T * T * HEAD_DIM * 2)       # scores + probs@V
            + 2 * T * HIDDEN * HIDDEN                    # attn output proj
            + 2 * 2 * T * HIDDEN * INTERMEDIATE)         # FFN up + down
        + 2 * T * HIDDEN * HIDDEN                        # pooler
        + 2 * T * HIDDEN * C_PAD)                        # classifier
    trans = (N_LAYERS * (N_HEADS * T * T + T * INTERMEDIATE)  # softmax exp + GELU tanh
             + T * HIDDEN                                     # pooler tanh
             + (2 * N_LAYERS + 1) * T)                        # LN rsqrt
    bytes_accessed = sum(int(v.size) * v.dtype.itemsize for v in inputs) + T * C_PAD * 4
    return pl.CostEstimate(flops=int(flops), transcendentals=int(trans),
                           bytes_accessed=int(bytes_accessed))


# ----------------- forward wrapper: one pallas_call for the whole model -----------------
def bert_classifier_forward(params, input_ids, attention_mask, token_type_ids):
    tok = jnp.stack([input_ids.astype(jnp.int32).reshape(T),
                     token_type_ids.astype(jnp.int32).reshape(T)], axis=1)    # (T, 2)
    mask_row = attention_mask.astype(jnp.float32).reshape(1, T)               # (1, T)

    inputs = (tok, mask_row,
              params["emb_tab"], params["wqkv"], params["wo"], params["w1"],
              params["w2"], params["vecs"], params["pool_w"], params["fc_w"])

    logits_pad = pl.pallas_call(
        _bert_fwd_kernel,
        out_shape=jax.ShapeDtypeStruct((T, C_PAD), jnp.float32),
        in_specs=[VMEM_SPEC] * len(inputs),
        out_specs=VMEM_SPEC,
        scratch_shapes=[pltpu.VMEM((T, HIDDEN), jnp.float32)],   # per-head context slab
        cost_estimate=_cost_estimate(inputs),
    )(*inputs)

    # CLS rows (token 0 of each sequence) and the real class columns.
    return logits_pad[::S, :NUM_CLASSES]


if __name__ == "__main__":
    key = jax.random.PRNGKey(0)
    pkey, ikey = jax.random.split(key)
    params = init_params(pkey)

    input_ids = jax.random.randint(ikey, (B, S), 0, VOCAB, dtype=jnp.int32)
    attention_mask = jnp.array(
        [[1, 1, 1, 1, 1, 1, 1, 1],
         [1, 1, 1, 1, 1, 0, 0, 0]], dtype=jnp.int32)
    token_type_ids = jnp.array(
        [[0, 0, 0, 0, 1, 1, 1, 1],
         [0, 0, 0, 1, 1, 1, 1, 1]], dtype=jnp.int32)

    fwd = jax.jit(bert_classifier_forward)
    out = jax.block_until_ready(fwd(params, input_ids, attention_mask, token_type_ids))
    assert out.shape == (B, NUM_CLASSES) and out.dtype == jnp.float32
    assert bool(jnp.all(jnp.isfinite(out)))
    print("KERNEL_OK")
</pallas_src>

<mosaic_0001>
module attributes {stable_mosaic.version = 11 : i64} {
  func.func @_bert_fwd_kernel(%arg0: memref<16x2xi32, #tpu.memory_space<vmem>>, %arg1: memref<1x16xf32, #tpu.memory_space<vmem>>, %arg2: memref<256x32xbf16, #tpu.memory_space<vmem>>, %arg3: memref<2x32x96xbf16, #tpu.memory_space<vmem>>, %arg4: memref<2x32x32xbf16, #tpu.memory_space<vmem>>, %arg5: memref<2x32x64xbf16, #tpu.memory_space<vmem>>, %arg6: memref<2x64x32xbf16, #tpu.memory_space<vmem>>, %arg7: memref<3x8x128xf32, #tpu.memory_space<vmem>>, %arg8: memref<32x32xbf16, #tpu.memory_space<vmem>>, %arg9: memref<32x128xbf16, #tpu.memory_space<vmem>>, %arg10: memref<16x128xf32, #tpu.memory_space<vmem>>, %arg11: memref<16x32xf32, #tpu.memory_space<vmem>>) attributes {dimension_semantics = [], scalar_prefetch = 0 : i64, scratch_operands = 1 : i64, tpu.core_type = #tpu.core_type<tc>} {
    %c0 = arith.constant 0 : index
    %c0_0 = arith.constant 0 : index
    %0 = vector.load %arg0[%c0, %c0_0] : memref<16x2xi32, #tpu.memory_space<vmem>>, vector<16x2xi32>
    %1 = vector.extract_strided_slice %0 {offsets = [0, 0], sizes = [16, 1], strides = [1, 1]} : vector<16x2xi32> to vector<16x1xi32>
    %2 = vector.extract_strided_slice %0 {offsets = [0, 1], sizes = [16, 1], strides = [1, 1]} : vector<16x2xi32> to vector<16x1xi32>
    %3 = tpu.iota {dimensions = array<i32: 0>} : vector<16x1xi32>
    %c7_i32 = arith.constant 7 : i32
    %4 = vector.broadcast %c7_i32 : i32 to vector<16x1xi32>
    %5 = arith.andi %3, %4 : vector<16x1xi32>
    %6 = tpu.iota {dimensions = array<i32: 1>} : vector<16x256xi32>
    %7 = vector.broadcast %1 : vector<16x1xi32> to vector<16x256xi32>
    %8 = arith.cmpi eq, %6, %7 : vector<16x256xi32>
    %c128_i32 = arith.constant 128 : i32
    %9 = vector.broadcast %c128_i32 : i32 to vector<16x1xi32>
    %10 = arith.addi %5, %9 : vector<16x1xi32>
    %11 = vector.broadcast %10 : vector<16x1xi32> to vector<16x256xi32>
    %12 = arith.cmpi eq, %6, %11 : vector<16x256xi32>
    %13 = arith.ori %8, %12 : vector<16x256xi1>
    %c192_i32 = arith.constant 192 : i32
    %14 = vector.broadcast %c192_i32 : i32 to vector<16x1xi32>
    %15 = arith.addi %2, %14 : vector<16x1xi32>
    %16 = vector.broadcast %15 : vector<16x1xi32> to vector<16x256xi32>
    %17 = arith.cmpi eq, %6, %16 : vector<16x256xi32>
    %18 = arith.ori %13, %17 : vector<16x256xi1>
    %cst = arith.constant 1.000000e+00 : f32
    %cst_1 = arith.constant 0.000000e+00 : f32
    %19 = vector.broadcast %cst : f32 to vector<16x256xf32>
    %20 = vector.broadcast %cst_1 : f32 to vector<16x256xf32>
    %21 = arith.select %18, %19, %20 : vector<16x256xi1>, vector<16x256xf32>
    %22 = arith.truncf %21 : vector<16x256xf32> to vector<16x256xbf16>
    %c0_2 = arith.constant 0 : index
    %c0_3 = arith.constant 0 : index
    %23 = vector.load %arg2[%c0_2, %c0_3] : memref<256x32xbf16, #tpu.memory_space<vmem>>, vector<256x32xbf16>
    %cst_4 = arith.constant dense<0.000000e+00> : vector<16x32xf32>
    %24 = tpu.matmul %22, %23, %cst_4 {dimension_numbers = #tpu.dot_dimension_numbers<[1], [0], [0], [1], [0, 0, 1, 1], [], []>} : vector<16x256xbf16>, vector<256x32xbf16>, vector<16x32xf32> -> vector<16x32xf32>
    %c2 = arith.constant 2 : index
    %c0_5 = arith.constant 0 : index
    %c0_6 = arith.constant 0 : index
    %25 = vector.load %arg7[%c2, %c0_5, %c0_6] : memref<3x8x128xf32, #tpu.memory_space<vmem>>, vector<1x8x128xf32>
    %26 = vector.shape_cast %25 : vector<1x8x128xf32> to vector<8x128xf32>
    %27 = vector.extract_strided_slice %26 {offsets = [0, 0], sizes = [1, 32], strides = [1, 1]} : vector<8x128xf32> to vector<1x32xf32>
    %28 = vector.extract_strided_slice %26 {offsets = [1, 0], sizes = [1, 32], strides = [1, 1]} : vector<8x128xf32> to vector<1x32xf32>
    %29 = vector.extract_strided_slice %26 {offsets = [2, 0], sizes = [1, 32], strides = [1, 1]} : vector<8x128xf32> to vector<1x32xf32>
    %30 = vector.extract_strided_slice %26 {offsets = [3, 0], sizes = [1, 128], strides = [1, 1]} : vector<8x128xf32> to vector<1x128xf32>
    %cst_7 = arith.constant dense<0.000000e+00> : vector<16xf32>
    %31 = vector.multi_reduction <add>, %24, %cst_7 [1] : vector<16x32xf32> to vector<16xf32>
    %32 = vector.shape_cast %31 : vector<16xf32> to vector<16x1xf32>
    %cst_8 = arith.constant 3.200000e+01 : f32
    %33 = vector.broadcast %cst_8 : f32 to vector<16x1xf32>
    %34 = arith.divf %32, %33 : vector<16x1xf32>
    %35 = vector.broadcast %34 : vector<16x1xf32> to vector<16x32xf32>
    %36 = arith.subf %24, %35 : vector<16x32xf32>
    %37 = arith.mulf %36, %36 : vector<16x32xf32>
    %cst_9 = arith.constant dense<0.000000e+00> : vector<16xf32>
    %38 = vector.multi_reduction <add>, %37, %cst_9 [1] : vector<16x32xf32> to vector<16xf32>
    %39 = vector.shape_cast %38 : vector<16xf32> to vector<16x1xf32>
    %cst_10 = arith.constant 3.200000e+01 : f32
    %40 = vector.broadcast %cst_10 : f32 to vector<16x1xf32>
    %41 = arith.divf %39, %40 : vector<16x1xf32>
    %42 = vector.broadcast %34 : vector<16x1xf32> to vector<16x32xf32>
    %43 = arith.subf %24, %42 : vector<16x32xf32>
    %cst_11 = arith.constant 9.99999996E-13 : f32
    %44 = vector.broadcast %cst_11 : f32 to vector<16x1xf32>
    %45 = arith.addf %41, %44 : vector<16x1xf32>
    %46 = math.rsqrt %45 : vector<16x1xf32>
    %47 = vector.broadcast %46 : vector<16x1xf32> to vector<16x32xf32>
    %48 = arith.mulf %43, %47 : vector<16x32xf32>
    %49 = vector.broadcast %27 : vector<1x32xf32> to vector<16x32xf32>
    %50 = arith.mulf %48, %49 : vector<16x32xf32>
    %51 = vector.broadcast %28 : vector<1x32xf32> to vector<16x32xf32>
    %52 = arith.addf %50, %51 : vector<16x32xf32>
    %53 = tpu.iota {dimensions = array<i32: 0>} : vector<16x16xi32>
    %54 = tpu.iota {dimensions = array<i32: 1>} : vector<16x16xi32>
    %c3_i32 = arith.constant 3 : i32
    %55 = vector.broadcast %c3_i32 : i32 to vector<16x16xi32>
    %56 = arith.shrsi %53, %55 : vector<16x16xi32>
    %c3_i32_12 = arith.constant 3 : i32
    %57 = vector.broadcast %c3_i32_12 : i32 to vector<16x16xi32>
    %58 = arith.shrsi %54, %57 : vector<16x16xi32>
    %59 = arith.cmpi eq, %56, %58 : vector<16x16xi32>
    %c0_13 = arith.constant 0 : index
    %c0_14 = arith.constant 0 : index
    %60 = vector.load %arg1[%c0_13, %c0_14] : memref<1x16xf32, #tpu.memory_space<vmem>>, vector<1x16xf32>
    %cst_15 = arith.constant 5.000000e-01 : f32
    %61 = vector.broadcast %cst_15 : f32 to vector<1x16xf32>
    %62 = arith.cmpf ogt, %60, %61 : vector<1x16xf32>
    %63 = vector.broadcast %62 : vector<1x16xi1> to vector<16x16xi1>
    %64 = arith.andi %59, %63 : vector<16x16xi1>
    %cst_16 = arith.constant 0.000000e+00 : f32
    %cst_17 = arith.constant -1.000000e+04 : f32
    %65 = vector.broadcast %cst_16 : f32 to vector<16x16xf32>
    %66 = vector.broadcast %cst_17 : f32 to vector<16x16xf32>
    %67 = arith.select %64, %65, %66 : vector<16x16xi1>, vector<16x16xf32>
    %c0_18 = arith.constant 0 : index
    %c0_19 = arith.constant 0 : index
    %c0_20 = arith.constant 0 : index
    %68 = vector.load %arg7[%c0_18, %c0_19, %c0_20] : memref<3x8x128xf32, #tpu.memory_space<vmem>>, vector<1x8x128xf32>
    %69 = vector.shape_cast %68 : vector<1x8x128xf32> to vector<8x128xf32>
    %70 = vector.extract_strided_slice %69 {offsets = [0, 0], sizes = [1, 96], strides = [1, 1]} : vector<8x128xf32> to vector<1x96xf32>
    %71 = vector.extract_strided_slice %69 {offsets = [1, 0], sizes = [1, 32], strides = [1, 1]} : vector<8x128xf32> to vector<1x32xf32>
    %72 = vector.extract_strided_slice %69 {offsets = [2, 0], sizes = [1, 32], strides = [1, 1]} : vector<8x128xf32> to vector<1x32xf32>
    %73 = vector.extract_strided_slice %69 {offsets = [3, 0], sizes = [1, 32], strides = [1, 1]} : vector<8x128xf32> to vector<1x32xf32>
    %74 = vector.extract_strided_slice %69 {offsets = [4, 0], sizes = [1, 64], strides = [1, 1]} : vector<8x128xf32> to vector<1x64xf32>
    %75 = vector.extract_strided_slice %69 {offsets = [5, 0], sizes = [1, 32], strides = [1, 1]} : vector<8x128xf32> to vector<1x32xf32>
    %76 = vector.extract_strided_slice %69 {offsets = [6, 0], sizes = [1, 32], strides = [1, 1]} : vector<8x128xf32> to vector<1x32xf32>
    %77 = vector.extract_strided_slice %69 {offsets = [7, 0], sizes = [1, 32], strides = [1, 1]} : vector<8x128xf32> to vector<1x32xf32>
    %78 = arith.truncf %52 : vector<16x32xf32> to vector<16x32xbf16>
    %c0_21 = arith.constant 0 : index
    %c0_22 = arith.constant 0 : index
    %c0_23 = arith.constant 0 : index
    %79 = vector.load %arg3[%c0_21, %c0_22, %c0_23] : memref<2x32x96xbf16, #tpu.memory_space<vmem>>, vector<1x32x96xbf16>
    %80 = vector.shape_cast %79 : vector<1x32x96xbf16> to vector<32x96xbf16>
    %cst_24 = arith.constant dense<0.000000e+00> : vector<16x96xf32>
    %81 = tpu.matmul %78, %80, %cst_24 {dimension_numbers = #tpu.dot_dimension_numbers<[1], [0], [0], [1], [0, 0, 1, 1], [], []>} : vector<16x32xbf16>, vector<32x96xbf16>, vector<16x96xf32> -> vector<16x96xf32>
    %82 = vector.broadcast %70 : vector<1x96xf32> to vector<16x96xf32>
    %83 = arith.addf %81, %82 : vector<16x96xf32>
    %84 = vector.extract_strided_slice %83 {offsets = [0, 0], sizes = [16, 48], strides = [1, 1]} : vector<16x96xf32> to vector<16x48xf32>
    %85 = vector.extract_strided_slice %84 {offsets = [0, 0], sizes = [16, 16], strides = [1, 1]} : vector<16x48xf32> to vector<16x16xf32>
    %86 = vector.extract_strided_slice %84 {offsets = [0, 16], sizes = [16, 16], strides = [1, 1]} : vector<16x48xf32> to vector<16x16xf32>
    %87 = vector.extract_strided_slice %84 {offsets = [0, 32], sizes = [16, 16], strides = [1, 1]} : vector<16x48xf32> to vector<16x16xf32>
    %88 = arith.truncf %85 : vector<16x16xf32> to vector<16x16xbf16>
    %89 = arith.truncf %86 : vector<16x16xf32> to vector<16x16xbf16>
    "tpu.trace_start"() <{level = 10 : i32, message = "qd,kd->qk"}> : () -> ()
    %cst_25 = arith.constant dense<0.000000e+00> : vector<16x16xf32>
    %90 = tpu.matmul %88, %89, %cst_25 {dimension_numbers = #tpu.dot_dimension_numbers<[1], [1], [0], [0], [0, 0, 1, 0], [], []>} : vector<16x16xbf16>, vector<16x16xbf16>, vector<16x16xf32> -> vector<16x16xf32>
    "tpu.trace_stop"() : () -> ()
    %cst_26 = arith.constant 2.500000e-01 : f32
    %91 = vector.broadcast %cst_26 : f32 to vector<16x16xf32>
    %92 = arith.mulf %90, %91 : vector<16x16xf32>
    %93 = arith.addf %92, %67 : vector<16x16xf32>
    %cst_27 = arith.constant dense<0xFF800000> : vector<16xf32>
    %94 = vector.multi_reduction <maximumf>, %93, %cst_27 [1] : vector<16x16xf32> to vector<16xf32>
    %95 = vector.shape_cast %94 : vector<16xf32> to vector<16x1xf32>
    %96 = vector.broadcast %95 : vector<16x1xf32> to vector<16x16xf32>
    %97 = arith.subf %93, %96 : vector<16x16xf32>
    %98 = math.exp %97 : vector<16x16xf32>
    %cst_28 = arith.constant dense<0.000000e+00> : vector<16xf32>
    %99 = vector.multi_reduction <add>, %98, %cst_28 [1] : vector<16x16xf32> to vector<16xf32>
    %100 = vector.shape_cast %99 : vector<16xf32> to vector<16x1xf32>
    %101 = tpu.reciprocal %100 {approx = true} : vector<16x1xf32> -> vector<16x1xf32>
    %102 = vector.broadcast %101 : vector<16x1xf32> to vector<16x16xf32>
    %103 = arith.mulf %98, %102 : vector<16x16xf32>
    %104 = arith.truncf %103 : vector<16x16xf32> to vector<16x16xbf16>
    %105 = arith.truncf %87 : vector<16x16xf32> to vector<16x16xbf16>
    %cst_29 = arith.constant dense<0.000000e+00> : vector<16x16xf32>
    %106 = tpu.matmul %104, %105, %cst_29 {dimension_numbers = #tpu.dot_dimension_numbers<[1], [0], [0], [1], [0, 0, 1, 1], [], []>} : vector<16x16xbf16>, vector<16x16xbf16>, vector<16x16xf32> -> vector<16x16xf32>
    %c0_30 = arith.constant 0 : index
    %c0_31 = arith.constant 0 : index
    %107 = vector.load %arg11[%c0_30, %c0_31] : memref<16x32xf32, #tpu.memory_space<vmem>>, vector<16x16xf32>
    tpu.vector_store %arg11[%c0_30, %c0_31], %106 {strides = array<i32>} : memref<16x32xf32, #tpu.memory_space<vmem>>, vector<16x16xf32>,
    %108 = vector.extract_strided_slice %83 {offsets = [0, 48], sizes = [16, 48], strides = [1, 1]} : vector<16x96xf32> to vector<16x48xf32>
    %109 = vector.extract_strided_slice %108 {offsets = [0, 0], sizes = [16, 16], strides = [1, 1]} : vector<16x48xf32> to vector<16x16xf32>
    %110 = vector.extract_strided_slice %108 {offsets = [0, 16], sizes = [16, 16], strides = [1, 1]} : vector<16x48xf32> to vector<16x16xf32>
    %111 = vector.extract_strided_slice %108 {offsets = [0, 32], sizes = [16, 16], strides = [1, 1]} : vector<16x48xf32> to vector<16x16xf32>
    %112 = arith.truncf %109 : vector<16x16xf32> to vector<16x16xbf16>
    %113 = arith.truncf %110 : vector<16x16xf32> to vector<16x16xbf16>
    "tpu.trace_start"() <{level = 10 : i32, message = "qd,kd->qk"}> : () -> ()
    %cst_32 = arith.constant dense<0.000000e+00> : vector<16x16xf32>
    %114 = tpu.matmul %112, %113, %cst_32 {dimension_numbers = #tpu.dot_dimension_numbers<[1], [1], [0], [0], [0, 0, 1, 0], [], []>} : vector<16x16xbf16>, vector<16x16xbf16>, vector<16x16xf32> -> vector<16x16xf32>
    "tpu.trace_stop"() : () -> ()
    %cst_33 = arith.constant 2.500000e-01 : f32
    %115 = vector.broadcast %cst_33 : f32 to vector<16x16xf32>
    %116 = arith.mulf %114, %115 : vector<16x16xf32>
    %117 = arith.addf %116, %67 : vector<16x16xf32>
    %cst_34 = arith.constant dense<0xFF800000> : vector<16xf32>
    %118 = vector.multi_reduction <maximumf>, %117, %cst_34 [1] : vector<16x16xf32> to vector<16xf32>
    %119 = vector.shape_cast %118 : vector<16xf32> to vector<16x1xf32>
    %120 = vector.broadcast %119 : vector<16x1xf32> to vector<16x16xf32>
    %121 = arith.subf %117, %120 : vector<16x16xf32>
    %122 = math.exp %121 : vector<16x16xf32>
    %cst_35 = arith.constant dense<0.000000e+00> : vector<16xf32>
    %123 = vector.multi_reduction <add>, %122, %cst_35 [1] : vector<16x16xf32> to vector<16xf32>
    %124 = vector.shape_cast %123 : vector<16xf32> to vector<16x1xf32>
    %125 = tpu.reciprocal %124 {approx = true} : vector<16x1xf32> -> vector<16x1xf32>
    %126 = vector.broadcast %125 : vector<16x1xf32> to vector<16x16xf32>
    %127 = arith.mulf %122, %126 : vector<16x16xf32>
    %128 = arith.truncf %127 : vector<16x16xf32> to vector<16x16xbf16>
    %129 = arith.truncf %111 : vector<16x16xf32> to vector<16x16xbf16>
    %cst_36 = arith.constant dense<0.000000e+00> : vector<16x16xf32>
    %130 = tpu.matmul %128, %129, %cst_36 {dimension_numbers = #tpu.dot_dimension_numbers<[1], [0], [0], [1], [0, 0, 1, 1], [], []>} : vector<16x16xbf16>, vector<16x16xbf16>, vector<16x16xf32> -> vector<16x16xf32>
    %c0_37 = arith.constant 0 : index
    %c16 = arith.constant 16 : index
    %131 = vector.load %arg11[%c0_37, %c16] : memref<16x32xf32, #tpu.memory_space<vmem>>, vector<16x16xf32>
    tpu.vector_store %arg11[%c0_37, %c16], %130 {strides = array<i32>} : memref<16x32xf32, #tpu.memory_space<vmem>>, vector<16x16xf32>,
    %c0_38 = arith.constant 0 : index
    %c0_39 = arith.constant 0 : index
    %132 = vector.load %arg11[%c0_38, %c0_39] : memref<16x32xf32, #tpu.memory_space<vmem>>, vector<16x32xf32>
    %133 = arith.truncf %132 : vector<16x32xf32> to vector<16x32xbf16>
    %c0_40 = arith.constant 0 : index
    %c0_41 = arith.constant 0 : index
    %c0_42 = arith.constant 0 : index
    %134 = vector.load %arg4[%c0_40, %c0_41, %c0_42] : memref<2x32x32xbf16, #tpu.memory_space<vmem>>, vector<1x32x32xbf16>
    %135 = vector.shape_cast %134 : vector<1x32x32xbf16> to vector<32x32xbf16>
    %cst_43 = arith.constant dense<0.000000e+00> : vector<16x32xf32>
    %136 = tpu.matmul %133, %135, %cst_43 {dimension_numbers = #tpu.dot_dimension_numbers<[1], [0], [0], [1], [0, 0, 1, 1], [], []>} : vector<16x32xbf16>, vector<32x32xbf16>, vector<16x32xf32> -> vector<16x32xf32>
    %137 = vector.broadcast %71 : vector<1x32xf32> to vector<16x32xf32>
    %138 = arith.addf %136, %137 : vector<16x32xf32>
    %139 = arith.addf %52, %138 : vector<16x32xf32>
    %cst_44 = arith.constant dense<0.000000e+00> : vector<16xf32>
    %140 = vector.multi_reduction <add>, %139, %cst_44 [1] : vector<16x32xf32> to vector<16xf32>
    %141 = vector.shape_cast %140 : vector<16xf32> to vector<16x1xf32>
    %cst_45 = arith.constant 3.200000e+01 : f32
    %142 = vector.broadcast %cst_45 : f32 to vector<16x1xf32>
    %143 = arith.divf %141, %142 : vector<16x1xf32>
    %144 = vector.broadcast %143 : vector<16x1xf32> to vector<16x32xf32>
    %145 = arith.subf %139, %144 : vector<16x32xf32>
    %146 = arith.mulf %145, %145 : vector<16x32xf32>
    %cst_46 = arith.constant dense<0.000000e+00> : vector<16xf32>
    %147 = vector.multi_reduction <add>, %146, %cst_46 [1] : vector<16x32xf32> to vector<16xf32>
    %148 = vector.shape_cast %147 : vector<16xf32> to vector<16x1xf32>
    %cst_47 = arith.constant 3.200000e+01 : f32
    %149 = vector.broadcast %cst_47 : f32 to vector<16x1xf32>
    %150 = arith.divf %148, %149 : vector<16x1xf32>
    %151 = vector.broadcast %143 : vector<16x1xf32> to vector<16x32xf32>
    %152 = arith.subf %139, %151 : vector<16x32xf32>
    %cst_48 = arith.constant 9.99999996E-13 : f32
    %153 = vector.broadcast %cst_48 : f32 to vector<16x1xf32>
    %154 = arith.addf %150, %153 : vector<16x1xf32>
    %155 = math.rsqrt %154 : vector<16x1xf32>
    %156 = vector.broadcast %155 : vector<16x1xf32> to vector<16x32xf32>
    %157 = arith.mulf %152, %156 : vector<16x32xf32>
    %158 = vector.broadcast %72 : vector<1x32xf32> to vector<16x32xf32>
    %159 = arith.mulf %157, %158 : vector<16x32xf32>
    %160 = vector.broadcast %73 : vector<1x32xf32> to vector<16x32xf32>
    %161 = arith.addf %159, %160 : vector<16x32xf32>
    %162 = arith.truncf %161 : vector<16x32xf32> to vector<16x32xbf16>
    %c0_49 = arith.constant 0 : index
    %c0_50 = arith.constant 0 : index
    %c0_51 = arith.constant 0 : index
    %163 = vector.load %arg5[%c0_49, %c0_50, %c0_51] : memref<2x32x64xbf16, #tpu.memory_space<vmem>>, vector<1x32x64xbf16>
    %164 = vector.shape_cast %163 : vector<1x32x64xbf16> to vector<32x64xbf16>
    %cst_52 = arith.constant dense<0.000000e+00> : vector<16x64xf32>
    %165 = tpu.matmul %162, %164, %cst_52 {dimension_numbers = #tpu.dot_dimension_numbers<[1], [0], [0], [1], [0, 0, 1, 1], [], []>} : vector<16x32xbf16>, vector<32x64xbf16>, vector<16x64xf32> -> vector<16x64xf32>
    %166 = vector.broadcast %74 : vector<1x64xf32> to vector<16x64xf32>
    %167 = arith.addf %165, %166 : vector<16x64xf32>
    %cst_53 = arith.constant 5.000000e-01 : f32
    %168 = vector.broadcast %cst_53 : f32 to vector<16x64xf32>
    %169 = arith.mulf %168, %167 : vector<16x64xf32>
    %cst_54 = arith.constant 4.471500e-02 : f32
    %170 = vector.broadcast %cst_54 : f32 to vector<16x64xf32>
    %171 = arith.mulf %170, %167 : vector<16x64xf32>
    %172 = arith.mulf %171, %167 : vector<16x64xf32>
    %173 = arith.mulf %172, %167 : vector<16x64xf32>
    %174 = arith.addf %167, %173 : vector<16x64xf32>
    %cst_55 = arith.constant 0.797884583 : f32
    %175 = vector.broadcast %cst_55 : f32 to vector<16x64xf32>
    %176 = arith.mulf %175, %174 : vector<16x64xf32>
    %177 = math.tanh %176 : vector<16x64xf32>
    %cst_56 = arith.constant 1.000000e+00 : f32
    %178 = vector.broadcast %cst_56 : f32 to vector<16x64xf32>
    %179 = arith.addf %178, %177 : vector<16x64xf32>
    %180 = arith.mulf %169, %179 : vector<16x64xf32>
    %181 = arith.truncf %180 : vector<16x64xf32> to vector<16x64xbf16>
    %c0_57 = arith.constant 0 : index
    %c0_58 = arith.constant 0 : index
    %c0_59 = arith.constant 0 : index
    %182 = vector.load %arg6[%c0_57, %c0_58, %c0_59] : memref<2x64x32xbf16, #tpu.memory_space<vmem>>, vector<1x64x32xbf16>
    %183 = vector.shape_cast %182 : vector<1x64x32xbf16> to vector<64x32xbf16>
    %cst_60 = arith.constant dense<0.000000e+00> : vector<16x32xf32>
    %184 = tpu.matmul %181, %183, %cst_60 {dimension_numbers = #tpu.dot_dimension_numbers<[1], [0], [0], [1], [0, 0, 1, 1], [], []>} : vector<16x64xbf16>, vector<64x32xbf16>, vector<16x32xf32> -> vector<16x32xf32>
    %185 = vector.broadcast %75 : vector<1x32xf32> to vector<16x32xf32>
    %186 = arith.addf %184, %185 : vector<16x32xf32>
    %187 = arith.addf %161, %186 : vector<16x32xf32>
    %cst_61 = arith.constant dense<0.000000e+00> : vector<16xf32>
    %188 = vector.multi_reduction <add>, %187, %cst_61 [1] : vector<16x32xf32> to vector<16xf32>
    %189 = vector.shape_cast %188 : vector<16xf32> to vector<16x1xf32>
    %cst_62 = arith.constant 3.200000e+01 : f32
    %190 = vector.broadcast %cst_62 : f32 to vector<16x1xf32>
    %191 = arith.divf %189, %190 : vector<16x1xf32>
    %192 = vector.broadcast %191 : vector<16x1xf32> to vector<16x32xf32>
    %193 = arith.subf %187, %192 : vector<16x32xf32>
    %194 = arith.mulf %193, %193 : vector<16x32xf32>
    %cst_63 = arith.constant dense<0.000000e+00> : vector<16xf32>
    %195 = vector.multi_reduction <add>, %194, %cst_63 [1] : vector<16x32xf32> to vector<16xf32>
    %196 = vector.shape_cast %195 : vector<16xf32> to vector<16x1xf32>
    %cst_64 = arith.constant 3.200000e+01 : f32
    %197 = vector.broadcast %cst_64 : f32 to vector<16x1xf32>
    %198 = arith.divf %196, %197 : vector<16x1xf32>
    %199 = vector.broadcast %191 : vector<16x1xf32> to vector<16x32xf32>
    %200 = arith.subf %187, %199 : vector<16x32xf32>
    %cst_65 = arith.constant 9.99999996E-13 : f32
    %201 = vector.broadcast %cst_65 : f32 to vector<16x1xf32>
    %202 = arith.addf %198, %201 : vector<16x1xf32>
    %203 = math.rsqrt %202 : vector<16x1xf32>
    %204 = vector.broadcast %203 : vector<16x1xf32> to vector<16x32xf32>
    %205 = arith.mulf %200, %204 : vector<16x32xf32>
    %206 = vector.broadcast %76 : vector<1x32xf32> to vector<16x32xf32>
    %207 = arith.mulf %205, %206 : vector<16x32xf32>
    %208 = vector.broadcast %77 : vector<1x32xf32> to vector<16x32xf32>
    %209 = arith.addf %207, %208 : vector<16x32xf32>
    %c1 = arith.constant 1 : index
    %c0_66 = arith.constant 0 : index
    %c0_67 = arith.constant 0 : index
    %210 = vector.load %arg7[%c1, %c0_66, %c0_67] : memref<3x8x128xf32, #tpu.memory_space<vmem>>, vector<1x8x128xf32>
    %211 = vector.shape_cast %210 : vector<1x8x128xf32> to vector<8x128xf32>
    %212 = vector.extract_strided_slice %211 {offsets = [0, 0], sizes = [1, 96], strides = [1, 1]} : vector<8x128xf32> to vector<1x96xf32>
    %213 = vector.extract_strided_slice %211 {offsets = [1, 0], sizes = [1, 32], strides = [1, 1]} : vector<8x128xf32> to vector<1x32xf32>
    %214 = vector.extract_strided_slice %211 {offsets = [2, 0], sizes = [1, 32], strides = [1, 1]} : vector<8x128xf32> to vector<1x32xf32>
    %215 = vector.extract_strided_slice %211 {offsets = [3, 0], sizes = [1, 32], strides = [1, 1]} : vector<8x128xf32> to vector<1x32xf32>
    %216 = vector.extract_strided_slice %211 {offsets = [4, 0], sizes = [1, 64], strides = [1, 1]} : vector<8x128xf32> to vector<1x64xf32>
    %217 = vector.extract_strided_slice %211 {offsets = [5, 0], sizes = [1, 32], strides = [1, 1]} : vector<8x128xf32> to vector<1x32xf32>
    %218 = vector.extract_strided_slice %211 {offsets = [6, 0], sizes = [1, 32], strides = [1, 1]} : vector<8x128xf32> to vector<1x32xf32>
    %219 = vector.extract_strided_slice %211 {offsets = [7, 0], sizes = [1, 32], strides = [1, 1]} : vector<8x128xf32> to vector<1x32xf32>
    %220 = arith.truncf %209 : vector<16x32xf32> to vector<16x32xbf16>
    %c1_68 = arith.constant 1 : index
    %c0_69 = arith.constant 0 : index
    %c0_70 = arith.constant 0 : index
    %221 = vector.load %arg3[%c1_68, %c0_69, %c0_70] : memref<2x32x96xbf16, #tpu.memory_space<vmem>>, vector<1x32x96xbf16>
    %222 = vector.shape_cast %221 : vector<1x32x96xbf16> to vector<32x96xbf16>
    %cst_71 = arith.constant dense<0.000000e+00> : vector<16x96xf32>
    %223 = tpu.matmul %220, %222, %cst_71 {dimension_numbers = #tpu.dot_dimension_numbers<[1], [0], [0], [1], [0, 0, 1, 1], [], []>} : vector<16x32xbf16>, vector<32x96xbf16>, vector<16x96xf32> -> vector<16x96xf32>
    %224 = vector.broadcast %212 : vector<1x96xf32> to vector<16x96xf32>
    %225 = arith.addf %223, %224 : vector<16x96xf32>
    %226 = vector.extract_strided_slice %225 {offsets = [0, 0], sizes = [16, 48], strides = [1, 1]} : vector<16x96xf32> to vector<16x48xf32>
    %227 = vector.extract_strided_slice %226 {offsets = [0, 0], sizes = [16, 16], strides = [1, 1]} : vector<16x48xf32> to vector<16x16xf32>
    %228 = vector.extract_strided_slice %226 {offsets = [0, 16], sizes = [16, 16], strides = [1, 1]} : vector<16x48xf32> to vector<16x16xf32>
    %229 = vector.extract_strided_slice %226 {offsets = [0, 32], sizes = [16, 16], strides = [1, 1]} : vector<16x48xf32> to vector<16x16xf32>
    %230 = arith.truncf %227 : vector<16x16xf32> to vector<16x16xbf16>
    %231 = arith.truncf %228 : vector<16x16xf32> to vector<16x16xbf16>
    "tpu.trace_start"() <{level = 10 : i32, message = "qd,kd->qk"}> : () -> ()
    %cst_72 = arith.constant dense<0.000000e+00> : vector<16x16xf32>
    %232 = tpu.matmul %230, %231, %cst_72 {dimension_numbers = #tpu.dot_dimension_numbers<[1], [1], [0], [0], [0, 0, 1, 0], [], []>} : vector<16x16xbf16>, vector<16x16xbf16>, vector<16x16xf32> -> vector<16x16xf32>
    "tpu.trace_stop"() : () -> ()
    %cst_73 = arith.constant 2.500000e-01 : f32
    %233 = vector.broadcast %cst_73 : f32 to vector<16x16xf32>
    %234 = arith.mulf %232, %233 : vector<16x16xf32>
    %235 = arith.addf %234, %67 : vector<16x16xf32>
    %cst_74 = arith.constant dense<0xFF800000> : vector<16xf32>
    %236 = vector.multi_reduction <maximumf>, %235, %cst_74 [1] : vector<16x16xf32> to vector<16xf32>
    %237 = vector.shape_cast %236 : vector<16xf32> to vector<16x1xf32>
    %238 = vector.broadcast %237 : vector<16x1xf32> to vector<16x16xf32>
    %239 = arith.subf %235, %238 : vector<16x16xf32>
    %240 = math.exp %239 : vector<16x16xf32>
    %cst_75 = arith.constant dense<0.000000e+00> : vector<16xf32>
    %241 = vector.multi_reduction <add>, %240, %cst_75 [1] : vector<16x16xf32> to vector<16xf32>
    %242 = vector.shape_cast %241 : vector<16xf32> to vector<16x1xf32>
    %243 = tpu.reciprocal %242 {approx = true} : vector<16x1xf32> -> vector<16x1xf32>
    %244 = vector.broadcast %243 : vector<16x1xf32> to vector<16x16xf32>
    %245 = arith.mulf %240, %244 : vector<16x16xf32>
    %246 = arith.truncf %245 : vector<16x16xf32> to vector<16x16xbf16>
    %247 = arith.truncf %229 : vector<16x16xf32> to vector<16x16xbf16>
    %cst_76 = arith.constant dense<0.000000e+00> : vector<16x16xf32>
    %248 = tpu.matmul %246, %247, %cst_76 {dimension_numbers = #tpu.dot_dimension_numbers<[1], [0], [0], [1], [0, 0, 1, 1], [], []>} : vector<16x16xbf16>, vector<16x16xbf16>, vector<16x16xf32> -> vector<16x16xf32>
    %c0_77 = arith.constant 0 : index
    %c0_78 = arith.constant 0 : index
    %249 = vector.load %arg11[%c0_77, %c0_78] : memref<16x32xf32, #tpu.memory_space<vmem>>, vector<16x16xf32>
    tpu.vector_store %arg11[%c0_77, %c0_78], %248 {strides = array<i32>} : memref<16x32xf32, #tpu.memory_space<vmem>>, vector<16x16xf32>,
    %250 = vector.extract_strided_slice %225 {offsets = [0, 48], sizes = [16, 48], strides = [1, 1]} : vector<16x96xf32> to vector<16x48xf32>
    %251 = vector.extract_strided_slice %250 {offsets = [0, 0], sizes = [16, 16], strides = [1, 1]} : vector<16x48xf32> to vector<16x16xf32>
    %252 = vector.extract_strided_slice %250 {offsets = [0, 16], sizes = [16, 16], strides = [1, 1]} : vector<16x48xf32> to vector<16x16xf32>
    %253 = vector.extract_strided_slice %250 {offsets = [0, 32], sizes = [16, 16], strides = [1, 1]} : vector<16x48xf32> to vector<16x16xf32>
    %254 = arith.truncf %251 : vector<16x16xf32> to vector<16x16xbf16>
    %255 = arith.truncf %252 : vector<16x16xf32> to vector<16x16xbf16>
    "tpu.trace_start"() <{level = 10 : i32, message = "qd,kd->qk"}> : () -> ()
    %cst_79 = arith.constant dense<0.000000e+00> : vector<16x16xf32>
    %256 = tpu.matmul %254, %255, %cst_79 {dimension_numbers = #tpu.dot_dimension_numbers<[1], [1], [0], [0], [0, 0, 1, 0], [], []>} : vector<16x16xbf16>, vector<16x16xbf16>, vector<16x16xf32> -> vector<16x16xf32>
    "tpu.trace_stop"() : () -> ()
    %cst_80 = arith.constant 2.500000e-01 : f32
    %257 = vector.broadcast %cst_80 : f32 to vector<16x16xf32>
    %258 = arith.mulf %256, %257 : vector<16x16xf32>
    %259 = arith.addf %258, %67 : vector<16x16xf32>
    %cst_81 = arith.constant dense<0xFF800000> : vector<16xf32>
    %260 = vector.multi_reduction <maximumf>, %259, %cst_81 [1] : vector<16x16xf32> to vector<16xf32>
    %261 = vector.shape_cast %260 : vector<16xf32> to vector<16x1xf32>
    %262 = vector.broadcast %261 : vector<16x1xf32> to vector<16x16xf32>
    %263 = arith.subf %259, %262 : vector<16x16xf32>
    %264 = math.exp %263 : vector<16x16xf32>
    %cst_82 = arith.constant dense<0.000000e+00> : vector<16xf32>
    %265 = vector.multi_reduction <add>, %264, %cst_82 [1] : vector<16x16xf32> to vector<16xf32>
    %266 = vector.shape_cast %265 : vector<16xf32> to vector<16x1xf32>
    %267 = tpu.reciprocal %266 {approx = true} : vector<16x1xf32> -> vector<16x1xf32>
    %268 = vector.broadcast %267 : vector<16x1xf32> to vector<16x16xf32>
    %269 = arith.mulf %264, %268 : vector<16x16xf32>
    %270 = arith.truncf %269 : vector<16x16xf32> to vector<16x16xbf16>
    %271 = arith.truncf %253 : vector<16x16xf32> to vector<16x16xbf16>
    %cst_83 = arith.constant dense<0.000000e+00> : vector<16x16xf32>
    %272 = tpu.matmul %270, %271, %cst_83 {dimension_numbers = #tpu.dot_dimension_numbers<[1], [0], [0], [1], [0, 0, 1, 1], [], []>} : vector<16x16xbf16>, vector<16x16xbf16>, vector<16x16xf32> -> vector<16x16xf32>
    %c0_84 = arith.constant 0 : index
    %c16_85 = arith.constant 16 : index
    %273 = vector.load %arg11[%c0_84, %c16_85] : memref<16x32xf32, #tpu.memory_space<vmem>>, vector<16x16xf32>
    tpu.vector_store %arg11[%c0_84, %c16_85], %272 {strides = array<i32>} : memref<16x32xf32, #tpu.memory_space<vmem>>, vector<16x16xf32>,
    %c0_86 = arith.constant 0 : index
    %c0_87 = arith.constant 0 : index
    %274 = vector.load %arg11[%c0_86, %c0_87] : memref<16x32xf32, #tpu.memory_space<vmem>>, vector<16x32xf32>
    %275 = arith.truncf %274 : vector<16x32xf32> to vector<16x32xbf16>
    %c1_88 = arith.constant 1 : index
    %c0_89 = arith.constant 0 : index
    %c0_90 = arith.constant 0 : index
    %276 = vector.load %arg4[%c1_88, %c0_89, %c0_90] : memref<2x32x32xbf16, #tpu.memory_space<vmem>>, vector<1x32x32xbf16>
    %277 = vector.shape_cast %276 : vector<1x32x32xbf16> to vector<32x32xbf16>
    %cst_91 = arith.constant dense<0.000000e+00> : vector<16x32xf32>
    %278 = tpu.matmul %275, %277, %cst_91 {dimension_numbers = #tpu.dot_dimension_numbers<[1], [0], [0], [1], [0, 0, 1, 1], [], []>} : vector<16x32xbf16>, vector<32x32xbf16>, vector<16x32xf32> -> vector<16x32xf32>
    %279 = vector.broadcast %213 : vector<1x32xf32> to vector<16x32xf32>
    %280 = arith.addf %278, %279 : vector<16x32xf32>
    %281 = arith.addf %209, %280 : vector<16x32xf32>
    %cst_92 = arith.constant dense<0.000000e+00> : vector<16xf32>
    %282 = vector.multi_reduction <add>, %281, %cst_92 [1] : vector<16x32xf32> to vector<16xf32>
    %283 = vector.shape_cast %282 : vector<16xf32> to vector<16x1xf32>
    %cst_93 = arith.constant 3.200000e+01 : f32
    %284 = vector.broadcast %cst_93 : f32 to vector<16x1xf32>
    %285 = arith.divf %283, %284 : vector<16x1xf32>
    %286 = vector.broadcast %285 : vector<16x1xf32> to vector<16x32xf32>
    %287 = arith.subf %281, %286 : vector<16x32xf32>
    %288 = arith.mulf %287, %287 : vector<16x32xf32>
    %cst_94 = arith.constant dense<0.000000e+00> : vector<16xf32>
    %289 = vector.multi_reduction <add>, %288, %cst_94 [1] : vector<16x32xf32> to vector<16xf32>
    %290 = vector.shape_cast %289 : vector<16xf32> to vector<16x1xf32>
    %cst_95 = arith.constant 3.200000e+01 : f32
    %291 = vector.broadcast %cst_95 : f32 to vector<16x1xf32>
    %292 = arith.divf %290, %291 : vector<16x1xf32>
    %293 = vector.broadcast %285 : vector<16x1xf32> to vector<16x32xf32>
    %294 = arith.subf %281, %293 : vector<16x32xf32>
    %cst_96 = arith.constant 9.99999996E-13 : f32
    %295 = vector.broadcast %cst_96 : f32 to vector<16x1xf32>
    %296 = arith.addf %292, %295 : vector<16x1xf32>
    %297 = math.rsqrt %296 : vector<16x1xf32>
    %298 = vector.broadcast %297 : vector<16x1xf32> to vector<16x32xf32>
    %299 = arith.mulf %294, %298 : vector<16x32xf32>
    %300 = vector.broadcast %214 : vector<1x32xf32> to vector<16x32xf32>
    %301 = arith.mulf %299, %300 : vector<16x32xf32>
    %302 = vector.broadcast %215 : vector<1x32xf32> to vector<16x32xf32>
    %303 = arith.addf %301, %302 : vector<16x32xf32>
    %304 = arith.truncf %303 : vector<16x32xf32> to vector<16x32xbf16>
    %c1_97 = arith.constant 1 : index
    %c0_98 = arith.constant 0 : index
    %c0_99 = arith.constant 0 : index
    %305 = vector.load %arg5[%c1_97, %c0_98, %c0_99] : memref<2x32x64xbf16, #tpu.memory_space<vmem>>, vector<1x32x64xbf16>
    %306 = vector.shape_cast %305 : vector<1x32x64xbf16> to vector<32x64xbf16>
    %cst_100 = arith.constant dense<0.000000e+00> : vector<16x64xf32>
    %307 = tpu.matmul %304, %306, %cst_100 {dimension_numbers = #tpu.dot_dimension_numbers<[1], [0], [0], [1], [0, 0, 1, 1], [], []>} : vector<16x32xbf16>, vector<32x64xbf16>, vector<16x64xf32> -> vector<16x64xf32>
    %308 = vector.broadcast %216 : vector<1x64xf32> to vector<16x64xf32>
    %309 = arith.addf %307, %308 : vector<16x64xf32>
    %cst_101 = arith.constant 5.000000e-01 : f32
    %310 = vector.broadcast %cst_101 : f32 to vector<16x64xf32>
    %311 = arith.mulf %310, %309 : vector<16x64xf32>
    %cst_102 = arith.constant 4.471500e-02 : f32
    %312 = vector.broadcast %cst_102 : f32 to vector<16x64xf32>
    %313 = arith.mulf %312, %309 : vector<16x64xf32>
    %314 = arith.mulf %313, %309 : vector<16x64xf32>
    %315 = arith.mulf %314, %309 : vector<16x64xf32>
    %316 = arith.addf %309, %315 : vector<16x64xf32>
    %cst_103 = arith.constant 0.797884583 : f32
    %317 = vector.broadcast %cst_103 : f32 to vector<16x64xf32>
    %318 = arith.mulf %317, %316 : vector<16x64xf32>
    %319 = math.tanh %318 : vector<16x64xf32>
    %cst_104 = arith.constant 1.000000e+00 : f32
    %320 = vector.broadcast %cst_104 : f32 to vector<16x64xf32>
    %321 = arith.addf %320, %319 : vector<16x64xf32>
    %322 = arith.mulf %311, %321 : vector<16x64xf32>
    %323 = arith.truncf %322 : vector<16x64xf32> to vector<16x64xbf16>
    %c1_105 = arith.constant 1 : index
    %c0_106 = arith.constant 0 : index
    %c0_107 = arith.constant 0 : index
    %324 = vector.load %arg6[%c1_105, %c0_106, %c0_107] : memref<2x64x32xbf16, #tpu.memory_space<vmem>>, vector<1x64x32xbf16>
    %325 = vector.shape_cast %324 : vector<1x64x32xbf16> to vector<64x32xbf16>
    %cst_108 = arith.constant dense<0.000000e+00> : vector<16x32xf32>
    %326 = tpu.matmul %323, %325, %cst_108 {dimension_numbers = #tpu.dot_dimension_numbers<[1], [0], [0], [1], [0, 0, 1, 1], [], []>} : vector<16x64xbf16>, vector<64x32xbf16>, vector<16x32xf32> -> vector<16x32xf32>
    %327 = vector.broadcast %217 : vector<1x32xf32> to vector<16x32xf32>
    %328 = arith.addf %326, %327 : vector<16x32xf32>
    %329 = arith.addf %303, %328 : vector<16x32xf32>
    %cst_109 = arith.constant dense<0.000000e+00> : vector<16xf32>
    %330 = vector.multi_reduction <add>, %329, %cst_109 [1] : vector<16x32xf32> to vector<16xf32>
    %331 = vector.shape_cast %330 : vector<16xf32> to vector<16x1xf32>
    %cst_110 = arith.constant 3.200000e+01 : f32
    %332 = vector.broadcast %cst_110 : f32 to vector<16x1xf32>
    %333 = arith.divf %331, %332 : vector<16x1xf32>
    %334 = vector.broadcast %333 : vector<16x1xf32> to vector<16x32xf32>
    %335 = arith.subf %329, %334 : vector<16x32xf32>
    %336 = arith.mulf %335, %335 : vector<16x32xf32>
    %cst_111 = arith.constant dense<0.000000e+00> : vector<16xf32>
    %337 = vector.multi_reduction <add>, %336, %cst_111 [1] : vector<16x32xf32> to vector<16xf32>
    %338 = vector.shape_cast %337 : vector<16xf32> to vector<16x1xf32>
    %cst_112 = arith.constant 3.200000e+01 : f32
    %339 = vector.broadcast %cst_112 : f32 to vector<16x1xf32>
    %340 = arith.divf %338, %339 : vector<16x1xf32>
    %341 = vector.broadcast %333 : vector<16x1xf32> to vector<16x32xf32>
    %342 = arith.subf %329, %341 : vector<16x32xf32>
    %cst_113 = arith.constant 9.99999996E-13 : f32
    %343 = vector.broadcast %cst_113 : f32 to vector<16x1xf32>
    %344 = arith.addf %340, %343 : vector<16x1xf32>
    %345 = math.rsqrt %344 : vector<16x1xf32>
    %346 = vector.broadcast %345 : vector<16x1xf32> to vector<16x32xf32>
    %347 = arith.mulf %342, %346 : vector<16x32xf32>
    %348 = vector.broadcast %218 : vector<1x32xf32> to vector<16x32xf32>
    %349 = arith.mulf %347, %348 : vector<16x32xf32>
    %350 = vector.broadcast %219 : vector<1x32xf32> to vector<16x32xf32>
    %351 = arith.addf %349, %350 : vector<16x32xf32>
    %352 = arith.truncf %351 : vector<16x32xf32> to vector<16x32xbf16>
    %c0_114 = arith.constant 0 : index
    %c0_115 = arith.constant 0 : index
    %353 = vector.load %arg8[%c0_114, %c0_115] : memref<32x32xbf16, #tpu.memory_space<vmem>>, vector<32x32xbf16>
    %cst_116 = arith.constant dense<0.000000e+00> : vector<16x32xf32>
    %354 = tpu.matmul %352, %353, %cst_116 {dimension_numbers = #tpu.dot_dimension_numbers<[1], [0], [0], [1], [0, 0, 1, 1], [], []>} : vector<16x32xbf16>, vector<32x32xbf16>, vector<16x32xf32> -> vector<16x32xf32>
    %355 = vector.broadcast %29 : vector<1x32xf32> to vector<16x32xf32>
    %356 = arith.addf %354, %355 : vector<16x32xf32>
    %357 = math.tanh %356 : vector<16x32xf32>
    %358 = arith.truncf %357 : vector<16x32xf32> to vector<16x32xbf16>
    %c0_117 = arith.constant 0 : index
    %c0_118 = arith.constant 0 : index
    %359 = vector.load %arg9[%c0_117, %c0_118] : memref<32x128xbf16, #tpu.memory_space<vmem>>, vector<32x128xbf16>
    %cst_119 = arith.constant dense<0.000000e+00> : vector<16x128xf32>
    %360 = tpu.matmul %358, %359, %cst_119 {dimension_numbers = #tpu.dot_dimension_numbers<[1], [0], [0], [1], [0, 0, 1, 1], [], []>} : vector<16x32xbf16>, vector<32x128xbf16>, vector<16x128xf32> -> vector<16x128xf32>
    %361 = vector.broadcast %30 : vector<1x128xf32> to vector<16x128xf32>
    %362 = arith.addf %360, %361 : vector<16x128xf32>
    %c0_120 = arith.constant 0 : index
    %c0_121 = arith.constant 0 : index
    %363 = vector.load %arg10[%c0_120, %c0_121] : memref<16x128xf32, #tpu.memory_space<vmem>>, vector<16x128xf32>
    tpu.vector_store %arg10[%c0_120, %c0_121], %362 {strides = array<i32>} : memref<16x128xf32, #tpu.memory_space<vmem>>, vector<16x128xf32>,
    return
  }
}

</mosaic_0001>

<llo_original>
// kernel: bert_classifier_forward.1
$region0: #{bert_classifier_forward.1}
  #allocation0 [shape = 'u32[]', space=smem, size = 0x4, offset = 0x4, fixed_abs, tag = 'smem constant byte address 0x4 - core index']
  #allocation1 [shape = 'u32[72,128]{1,0:T(1,128)}', space=vmem, size = 0x9000, scoped, tag = 'internal scratch']
  #allocation2 [shape = 'f32[16,32]{1,0:T(8,128)}', space=vmem, size = 0x2000, scoped, tag = 'scratch operand']
  %s0 = inlined_call_operand.vmem [shape: s32[16,2], index: 0, kind: input, shape index: {}]
  %s1 = inlined_call_operand.vmem [shape: f32[1,16], index: 1, kind: input, shape index: {}]
  %s2 = inlined_call_operand.vmem [shape: bf16[256,32], index: 2, kind: input, shape index: {}]
  %s3 = inlined_call_operand.vmem [shape: bf16[2,32,96], index: 3, kind: input, shape index: {}]
  %s4 = inlined_call_operand.vmem [shape: bf16[2,32,32], index: 4, kind: input, shape index: {}]
  %s5 = inlined_call_operand.vmem [shape: bf16[2,32,64], index: 5, kind: input, shape index: {}]
  %s6 = inlined_call_operand.vmem [shape: bf16[2,64,32], index: 6, kind: input, shape index: {}]
  %s7 = inlined_call_operand.vmem [shape: f32[3,8,128], index: 7, kind: input, shape index: {}]
  %s8 = inlined_call_operand.vmem [shape: bf16[32,32], index: 8, kind: input, shape index: {}]
  %s9 = inlined_call_operand.vmem [shape: bf16[32,128], index: 9, kind: input, shape index: {}]
  %s10 = inlined_call_operand.vmem [shape: f32[16,128], index: 10, kind: output, shape index: {}]
  %s11 = sld [smem:[#allocation0]]
  $region50: #{bert_classifier_forward.1} parent=0
    _
  %s13 = ssub.s32 1, %s11
  %s14 = scalar_select 0, %s13, %s11
  // Predicated region
  $region2: #{bert_classifier_forward.1} parent=0 // pred_check
    _
  $region3: #{bert_classifier_forward.1} parent=0 // pred_check_branch
    %16 = sbr.rel (0) target = $region5
  $region4: #{bert_classifier_forward.1} parent=0 // pred_region
    _
  $region5: #{bert_classifier_forward.1} parent=0 // pred_fallthru
    _
  // Predicated region
  $region6: #{bert_classifier_forward.1} parent=0 // pred_check
    _
  $region7: #{bert_classifier_forward.1} parent=0 // pred_check_branch
    %18 = sbr.rel (0) target = $region9
  $region8: #{bert_classifier_forward.1} parent=0 // pred_region
    _
  $region9: #{bert_classifier_forward.1} parent=0 // pred_fallthru
    _
  // Predicated region
  $region10: #{bert_classifier_forward.1} parent=0 // pred_check
    _
  $region11: #{bert_classifier_forward.1} parent=0 // pred_check_branch
    %20 = sbr.rel (0) target = $region13
  $region12: #{bert_classifier_forward.1} parent=0 // pred_region
    _
  $region13: #{bert_classifier_forward.1} parent=0 // pred_fallthru
    _
  // Predicated region
  $region14: #{bert_classifier_forward.1} parent=0 // pred_check
    _
  $region15: #{bert_classifier_forward.1} parent=0 // pred_check_branch
    %22 = sbr.rel (0) target = $region17
  $region16: #{bert_classifier_forward.1} parent=0 // pred_region
    _
  $region17: #{bert_classifier_forward.1} parent=0 // pred_fallthru
    _
  // Predicated region
  $region18: #{bert_classifier_forward.1} parent=0 // pred_check
    _
  $region19: #{bert_classifier_forward.1} parent=0 // pred_check_branch
    %24 = sbr.rel (0) target = $region21
  $region20: #{bert_classifier_forward.1} parent=0 // pred_region
    _
  $region21: #{bert_classifier_forward.1} parent=0 // pred_fallthru
    _
  // Predicated region
  $region22: #{bert_classifier_forward.1} parent=0 // pred_check
    _
  $region23: #{bert_classifier_forward.1} parent=0 // pred_check_branch
    %26 = sbr.rel (0) target = $region25
  $region24: #{bert_classifier_forward.1} parent=0 // pred_region
    _
  $region25: #{bert_classifier_forward.1} parent=0 // pred_fallthru
    _
  // Predicated region
  $region26: #{bert_classifier_forward.1} parent=0 // pred_check
    _
  $region27: #{bert_classifier_forward.1} parent=0 // pred_check_branch
    %28 = sbr.rel (0) target = $region29
  $region28: #{bert_classifier_forward.1} parent=0 // pred_region
    _
  $region29: #{bert_classifier_forward.1} parent=0 // pred_fallthru
    _
  // Predicated region
  $region30: #{bert_classifier_forward.1} parent=0 // pred_check
    _
  $region31: #{bert_classifier_forward.1} parent=0 // pred_check_branch
    %30 = sbr.rel (0) target = $region33
  $region32: #{bert_classifier_forward.1} parent=0 // pred_region
    _
  $region33: #{bert_classifier_forward.1} parent=0 // pred_fallthru
    _
  // Predicated region
  $region34: #{bert_classifier_forward.1} parent=0 // pred_check
    _
  $region35: #{bert_classifier_forward.1} parent=0 // pred_check_branch
    %32 = sbr.rel (0) target = $region37
  $region36: #{bert_classifier_forward.1} parent=0 // pred_region
    _
  $region37: #{bert_classifier_forward.1} parent=0 // pred_fallthru
    _
  // Predicated region
  $region38: #{bert_classifier_forward.1} parent=0 // pred_check
    _
  $region39: #{bert_classifier_forward.1} parent=0 // pred_check_branch
    %34 = sbr.rel (0) target = $region41
  $region40: #{bert_classifier_forward.1} parent=0 // pred_region
    _
  $region41: #{bert_classifier_forward.1} parent=0 // pred_fallthru
    _
  %v36 = vld [vmem:[%s0] sm:$0xff]
  %v37 = vld [vmem:[%s0 + $0x8] sm:$0xff]
  %v38 = vlaneseq
  %v39 = vshrl.u32 %v38, 7
  %v40 = vadd.s32 %v39, 8
  %v41 = vand.u32 %v39, 7
  %v42 = vand.u32 %v40, 7
  %v43 = vlaneseq
  %v44 = vand.u32 %v43, 127
  %v45 = vadd.s32 %v44, 128
  %46 = vset.pattern.permute.xlu0 0
  %47 = vperm.xlu0 %46, %v36
  %v48 = vpop.permute.xlu0 %47
  %49 = vset.pattern.permute.xlu0 0
  %50 = vperm.xlu0 %49, %v37
  %v51 = vpop.permute.xlu0 %50
  %vm52 = vcmp.eq.s32.totalorder %v44, %v48
  %vm53 = vcmp.eq.s32.totalorder %v45, %v48
  %vm54 = vcmp.eq.s32.totalorder %v44, %v51
  %vm55 = vcmp.eq.s32.totalorder %v45, %v51
  %v56 = vadd.s32 %v41, 128
  %v57 = vadd.s32 %v42, 128
  %vm58 = vcmp.eq.s32.totalorder %v44, %v56
  %vm59 = vcmp.eq.s32.totalorder %v45, %v56
  %vm60 = vcmp.eq.s32.totalorder %v44, %v57
  %vm61 = vcmp.eq.s32.totalorder %v45, %v57
  %vm62 = vmor %vm52, %vm58
  %vm63 = vmor %vm53, %vm59
  %vm64 = vmor %vm54, %vm60
  %vm65 = vmor %vm55, %vm61
  %v66 = vadd.s32 %v36, 192
  %v67 = vadd.s32 %v37, 192
  %68 = vset.pattern.permute.xlu0 1
  %69 = vperm.xlu0 %68, %v66
  %v70 = vpop.permute.xlu0 %69
  %71 = vset.pattern.permute.xlu0 1
  %72 = vperm.xlu0 %71, %v67
  %v73 = vpop.permute.xlu0 %72
  %vm74 = vcmp.eq.s32.totalorder %v44, %v70
  %vm75 = vcmp.eq.s32.totalorder %v45, %v70
  %vm76 = vcmp.eq.s32.totalorder %v44, %v73
  %vm77 = vcmp.eq.s32.totalorder %v45, %v73
  %vm78 = vmor %vm62, %vm74
  %vm79 = vmor %vm63, %vm75
  %vm80 = vmor %vm64, %vm76
  %vm81 = vmor %vm65, %vm77
  %v82 = vsel %vm78, 1.0, 0.0
  %v83 = vsel %vm79, 1.0, 0.0
  %v84 = vsel %vm80, 1.0, 0.0
  %v85 = vsel %vm81, 1.0, 0.0
  %v86 = vpack.c.bf16 %v84, %v82
  %v87 = vpack.c.bf16 %v85, %v83
  %v88 = vld [vmem:[%s2] sm:$0xf]
  %v89 = vld [vmem:[%s2 + $0x4] sm:$0xf]
  %v90 = vld [vmem:[%s2 + $0x8] sm:$0xf]
  %v91 = vld [vmem:[%s2 + $0xc] sm:$0xf]
  %v92 = vld [vmem:[%s2 + $0x10] sm:$0xf]
  %v93 = vld [vmem:[%s2 + $0x14] sm:$0xf]
  %v94 = vld [vmem:[%s2 + $0x18] sm:$0xf]
  %v95 = vld [vmem:[%s2 + $0x1c] sm:$0xf]
  %v96 = vld [vmem:[%s2 + $0x20] sm:$0xf]
  %v97 = vld [vmem:[%s2 + $0x24] sm:$0xf]
  %v98 = vld [vmem:[%s2 + $0x28] sm:$0xf]
  %v99 = vld [vmem:[%s2 + $0x2c] sm:$0xf]
  %v100 = vld [vmem:[%s2 + $0x30] sm:$0xf]
  %v101 = vld [vmem:[%s2 + $0x34] sm:$0xf]
  %v102 = vld [vmem:[%s2 + $0x38] sm:$0xf]
  %v103 = vld [vmem:[%s2 + $0x3c] sm:$0xf]
  %v104 = vld [vmem:[%s2 + $0x40] sm:$0xf]
  %v105 = vld [vmem:[%s2 + $0x44] sm:$0xf]
  %v106 = vld [vmem:[%s2 + $0x48] sm:$0xf]
  %v107 = vld [vmem:[%s2 + $0x4c] sm:$0xf]
  %v108 = vld [vmem:[%s2 + $0x50] sm:$0xf]
  %v109 = vld [vmem:[%s2 + $0x54] sm:$0xf]
  %v110 = vld [vmem:[%s2 + $0x58] sm:$0xf]
  %v111 = vld [vmem:[%s2 + $0x5c] sm:$0xf]
  %v112 = vld [vmem:[%s2 + $0x60] sm:$0xf]
  %v113 = vld [vmem:[%s2 + $0x64] sm:$0xf]
  %v114 = vld [vmem:[%s2 + $0x68] sm:$0xf]
  %v115 = vld [vmem:[%s2 + $0x6c] sm:$0xf]
  %v116 = vld [vmem:[%s2 + $0x70] sm:$0xf]
  %v117 = vld [vmem:[%s2 + $0x74] sm:$0xf]
  %v118 = vld [vmem:[%s2 + $0x78] sm:$0xf]
  %v119 = vld [vmem:[%s2 + $0x7c] sm:$0xf]
  %v152 = vunpack.c.l.b16 %v88
  %v153 = vunpack.c.l.b16 %v89
  %v154 = vunpack.c.l.b16 %v90
  %v155 = vunpack.c.l.b16 %v91
  %v156 = vunpack.c.l.b16 %v92
  %v157 = vunpack.c.l.b16 %v93
  %v158 = vunpack.c.l.b16 %v94
  %v159 = vunpack.c.l.b16 %v95
  %v160 = vunpack.c.l.b16 %v96
  %v161 = vunpack.c.l.b16 %v97
  %v162 = vunpack.c.l.b16 %v98
  %v163 = vunpack.c.l.b16 %v99
  %v164 = vunpack.c.l.b16 %v100
  %v165 = vunpack.c.l.b16 %v101
  %v166 = vunpack.c.l.b16 %v102
  %v167 = vunpack.c.l.b16 %v103
  %v168 = vunpack.c.l.b16 %v104
  %v169 = vunpack.c.l.b16 %v105
  %v170 = vunpack.c.l.b16 %v106
  %v171 = vunpack.c.l.b16 %v107
  %v172 = vunpack.c.l.b16 %v108
  %v173 = vunpack.c.l.b16 %v109
  %v174 = vunpack.c.l.b16 %v110
  %v175 = vunpack.c.l.b16 %v111
  %v176 = vunpack.c.l.b16 %v112
  %v177 = vunpack.c.l.b16 %v113
  %v178 = vunpack.c.l.b16 %v114
  %v179 = vunpack.c.l.b16 %v115
  %v180 = vunpack.c.l.b16 %v116
  %v181 = vunpack.c.l.b16 %v117
  %v182 = vunpack.c.l.b16 %v118
  %v183 = vunpack.c.l.b16 %v119
  %v184 = vpack.c.b16 %v153, %v152
  %v185 = vpack.c.b16 %v155, %v154
  %v186 = vpack.c.b16 %v157, %v156
  %v187 = vpack.c.b16 %v159, %v158
  %v188 = vpack.c.b16 %v161, %v160
  %v189 = vpack.c.b16 %v163, %v162
  %v190 = vpack.c.b16 %v165, %v164
  %v191 = vpack.c.b16 %v167, %v166
  %v192 = vpack.c.b16 %v169, %v168
  %v193 = vpack.c.b16 %v171, %v170
  %v194 = vpack.c.b16 %v173, %v172
  %v195 = vpack.c.b16 %v175, %v174
  %v196 = vpack.c.b16 %v177, %v176
  %v197 = vpack.c.b16 %v179, %v178
  %v198 = vpack.c.b16 %v181, %v180
  %v199 = vpack.c.b16 %v183, %v182
  %216 = vmatpush.bf16.msra.mxu0 %v191
  %217 = vmatpush.bf16.msra.mxu0 %v190
  %218 = vmatpush.bf16.msra.mxu0 %v189
  %219 = vmatpush.bf16.msra.mxu0 %v188
  %220 = vmatpush.bf16.msra.mxu0 %v187
  %221 = vmatpush.bf16.msra.mxu0 %v186
  %222 = vmatpush.bf16.msra.mxu0 %v185
  %223 = vmatpush.bf16.msra.mxu0 %v184
  %224 = vmatmul.bf16.gmra.mxu0 %v86
  %v225 = vpop.f32.mrf.mxu0
  %v226 = vadd.f32 0.0, %v225
  %v227 = vpop.f32.mrf.mxu0
  %v228 = vadd.f32 0.0, %v227
  %229 = vdwg.mxu0
  %230 = vmatpush.bf16.msra.mxu0 %v199
  %231 = vmatpush.bf16.msra.mxu0 %v198
  %232 = vmatpush.bf16.msra.mxu0 %v197
  %233 = vmatpush.bf16.msra.mxu0 %v196
  %234 = vmatpush.bf16.msra.mxu0 %v195
  %235 = vmatpush.bf16.msra.mxu0 %v194
  %236 = vmatpush.bf16.msra.mxu0 %v193
  %237 = vmatpush.bf16.msra.mxu0 %v192
  %238 = vmatmul.bf16.gmra.mxu0 %v87
  %v239 = vpop.f32.mrf.mxu0
  %v240 = vadd.f32 %v226, %v239
  %v241 = vpop.f32.mrf.mxu0
  %v242 = vadd.f32 %v228, %v241
  %243 = vdwg.mxu0
  %s244 = scalar_lea.vmem %s7, 16
  %v245 = vld [vmem:[%s244] sm:$0xff]
  %vm246 = vcmask 261120
  %v247 = vsel %vm246, %v240, 0.0
  %248 = vadd.xlane.f32.xlu0 %v247
  %v249 = vpop.xlane.xlu0 %248
  %v250 = vsel %vm246, %v242, 0.0
  %251 = vadd.xlane.f32.xlu0 %v250
  %v252 = vpop.xlane.xlu0 %251
  %v253 = vrcp.pop 32.0
  %v254 = vmul.f32 32.0, %v253
  %v255 = vsub.f32 1.0, %v254
  %v256 = vmul.f32 %v253, %v255
  %v257 = vadd.f32 %v253, %v256
  %vm258 = vweird.f32 %v253
  %v259 = vsel %vm258, %v253, %v257
  %v260 = vmul.f32 %v249, %v259
  %v261 = vmul.f32 %v252, %v259
  %v262 = vsub.f32 %v240, %v260
  %v263 = vsub.f32 %v242, %v261
  %v264 = vmul.f32 %v262, %v262
  %v265 = vmul.f32 %v263, %v263
  %v266 = vsel %vm246, %v264, 0.0
  %267 = vadd.xlane.f32.xlu0 %v266
  %v268 = vpop.xlane.xlu0 %267
  %v269 = vsel %vm246, %v265, 0.0
  %270 = vadd.xlane.f32.xlu0 %v269
  %v271 = vpop.xlane.xlu0 %270
  %v272 = vmul.f32 %v268, %v259
  %v273 = vmul.f32 %v271, %v259
  %v274 = vadd.f32 %v272, 1e-12
  %v275 = vadd.f32 %v273, 1e-12
  %v276 = vrsqrt.pop %v274
  %v277 = vmul.f32 %v276, %v274
  %v278 = vmul.f32 %v277, %v276
  %v279 = vmul.f32 0.5, %v278
  %v280 = vsub.f32 1.5, %v279
  %v281 = vmul.f32 %v276, %v280
  %vm282 = vweird.f32 %v274
  %vm283 = vweird.f32 %v276
  %vm284 = vmor %vm282, %vm283
  %v285 = vsel %vm284, %v276, %v281
  %v286 = vrsqrt.pop %v275
  %v287 = vmul.f32 %v286, %v275
  %v288 = vmul.f32 %v287, %v286
  %v289 = vmul.f32 0.5, %v288
  %v290 = vsub.f32 1.5, %v289
  %v291 = vmul.f32 %v286, %v290
  %vm292 = vweird.f32 %v275
  %vm293 = vweird.f32 %v286
  %vm294 = vmor %vm292, %vm293
  %v295 = vsel %vm294, %v286, %v291
  %v296 = vmul.f32 %v262, %v285
  %v297 = vmul.f32 %v263, %v295
  %v298 = vperm.slane %v245, 0
  %v299 = vmul.f32 %v296, %v298
  %v300 = vmul.f32 %v297, %v298
  %v301 = vperm.slane %v245, 1
  %v302 = vadd.f32 %v299, %v301
  %v303 = vadd.f32 %v300, %v301
  %v304 = vshra.s32 %v39, 3
  %v305 = vshra.s32 %v40, 3
  %v306 = vshra.s32 %v44, 3
  %vm307 = vcmp.eq.s32.totalorder %v304, %v306
  %vm308 = vcmp.eq.s32.totalorder %v305, %v306
  %v309 = vld [vmem:[%s1] sm:$0x1]
  %vm310 = vcmp.gt.f32.partialorder %v309, 0.5
  %v311 = vsel %vm310, 1, 0
  %v312 = vperm.slane %v311, 0
  %vm313 = vcmp.eq.s32.totalorder %v312, 1
  %vm314 = vmand %vm307, %vm313
  %vm315 = vmand %vm308, %vm313
  %v316 = vsel %vm314, 0.0, -10000.0
  %v317 = vsel %vm315, 0.0, -10000.0
  %v318 = vld [vmem:[%s7] sm:$0xff]
  %v319 = vpack.c.bf16 %v303, %v302
  %v320 = vld [vmem:[%s3] sm:$0xf]
  %v321 = vld [vmem:[%s3 + $0x4] sm:$0xf]
  %v322 = vld [vmem:[%s3 + $0x8] sm:$0xf]
  %v323 = vld [vmem:[%s3 + $0xc] sm:$0xf]
  %v324 = vperm.slane %v318, 0
  %v329 = vunpack.c.l.b16 %v320
  %v330 = vunpack.c.l.b16 %v321
  %v331 = vunpack.c.l.b16 %v322
  %v332 = vunpack.c.l.b16 %v323
  %v333 = vpack.c.b16 %v330, %v329
  %v334 = vpack.c.b16 %v332, %v331
  %v338 = vsel %vm246, %v319, 0
  %340 = vmatpush.bf16.msra.mxu0 0
  %341 = vmatpush.bf16.msra.mxu0 0
  %342 = vmatpush.bf16.msra.mxu0 0
  %343 = vmatpush.bf16.msra.mxu0 0
  %344 = vmatpush.bf16.msra.mxu0 0
  %345 = vmatpush.bf16.msra.mxu0 0
  %346 = vmatpush.bf16.msra.mxu0 %v334
  %347 = vmatpush.bf16.msra.mxu0 %v333
  %348 = vmatmul.bf16.gmra.mxu0 %v338
  %v349 = vpop.f32.mrf.mxu0
  %v350 = vadd.f32 %v324, %v349
  %v351 = vpop.f32.mrf.mxu0
  %v352 = vadd.f32 %v324, %v351
  %353 = vdwg.mxu0
  %v354 = vpack.c.bf16 %v352, %v350
  %356 = vrot.lane.b32.xlu0 %v354, 112
  %v357 = vpop.permute.xlu0 %356
  %vm358 = vcmask 130048
  %v360 = vsel %vm358, %v354, 0
  %v363 = vsel %vm358, %v357, 0
  %365 = vmatpush.bf16.xpose.msra.mxu0 0
  %366 = vmatpush.bf16.xpose.msra.mxu0 0
  %367 = vmatpush.bf16.xpose.msra.mxu0 0
  %368 = vmatpush.bf16.xpose.msra.mxu0 0
  %369 = vmatpush.bf16.xpose.msra.mxu0 0
  %370 = vmatpush.bf16.xpose.msra.mxu0 0
  %371 = vmatpush.bf16.xpose.msra.mxu0 0
  %372 = vmatpush.bf16.xpose.msra.mxu0 %v363
  %373 = vmatmul.bf16.gmra.mxu0 %v360
  %v374 = vpop.f32.mrf.mxu0
  %v375 = vadd.f32 0.0, %v374
  %v376 = vpop.f32.mrf.mxu0
  %v377 = vadd.f32 0.0, %v376
  %378 = vdwg.mxu0
  %v379 = vmul.f32 %v375, 0.25
  %v380 = vmul.f32 %v377, 0.25
  %v381 = vadd.f32 %v379, %v316
  %v382 = vadd.f32 %v380, %v317
  %v383 = vsel %vm358, %v381, -inf
  %384 = vmax.xlane.f32.xlu0 %v383
  %v385 = vpop.xlane.xlu0 %384
  %v386 = vsel %vm358, %v382, -inf
  %387 = vmax.xlane.f32.xlu0 %v386
  %v388 = vpop.xlane.xlu0 %387
  %v389 = vsub.f32 %v381, %v385
  %v390 = vsub.f32 %v382, %v388
  %v391 = vmul.f32 %v389, 1.442695
  %v392 = vpow.pop %v391
  %v393 = vmul.f32 %v390, 1.442695
  %v394 = vpow.pop %v393
  %v395 = vsel %vm358, %v392, 0.0
  %396 = vadd.xlane.f32.xlu0 %v395
  %v397 = vpop.xlane.xlu0 %396
  %v398 = vsel %vm358, %v394, 0.0
  %399 = vadd.xlane.f32.xlu0 %v398
  %v400 = vpop.xlane.xlu0 %399
  %v401 = vrcp.pop %v397
  %v402 = vrcp.pop %v400
  %v403 = vmul.f32 %v392, %v401
  %v404 = vmul.f32 %v394, %v402
  %v405 = vpack.c.bf16 %v404, %v403
  %406 = vrot.lane.b32.xlu0 %v354, 96
  %v407 = vpop.permute.xlu0 %406
  %v410 = vsel %vm358, %v405, 0
  %412 = vmatpush.bf16.msra.mxu0 0
  %413 = vmatpush.bf16.msra.mxu0 0
  %414 = vmatpush.bf16.msra.mxu0 0
  %415 = vmatpush.bf16.msra.mxu0 0
  %416 = vmatpush.bf16.msra.mxu0 0
  %417 = vmatpush.bf16.msra.mxu0 0
  %418 = vmatpush.bf16.msra.mxu0 0
  %419 = vmatpush.bf16.msra.mxu0 %v407
  %420 = vmatmul.bf16.gmra.mxu0 %v410
  %v421 = vpop.f32.mrf.mxu0
  %v422 = vadd.f32 0.0, %v421
  %v423 = vpop.f32.mrf.mxu0
  %v424 = vadd.f32 0.0, %v423
  %425 = vdwg.mxu0
  %426 = vst.msk [vmem:[#allocation2] sm:$0xff] %vm358, %v422
  %427 = vst.msk [vmem:[#allocation2 + $0x8] sm:$0xff] %vm358, %v424
  %428 = vrot.lane.b32.xlu0 %v354, 80
  %v429 = vpop.permute.xlu0 %428
  %430 = vrot.lane.b32.xlu0 %v354, 64
  %v431 = vpop.permute.xlu0 %430
  %v433 = vsel %vm358, %v429, 0
  %v436 = vsel %vm358, %v431, 0
  %438 = vmatpush.bf16.xpose.msra.mxu0 0
  %439 = vmatpush.bf16.xpose.msra.mxu0 0
  %440 = vmatpush.bf16.xpose.msra.mxu0 0
  %441 = vmatpush.bf16.xpose.msra.mxu0 0
  %442 = vmatpush.bf16.xpose.msra.mxu0 0
  %443 = vmatpush.bf16.xpose.msra.mxu0 0
  %444 = vmatpush.bf16.xpose.msra.mxu0 0
  %445 = vmatpush.bf16.xpose.msra.mxu0 %v436
  %446 = vmatmul.bf16.gmra.mxu0 %v433
  %v447 = vpop.f32.mrf.mxu0
  %v448 = vadd.f32 0.0, %v447
  %v449 = vpop.f32.mrf.mxu0
  %v450 = vadd.f32 0.0, %v449
  %451 = vdwg.mxu0
  %v452 = vmul.f32 %v448, 0.25
  %v453 = vmul.f32 %v450, 0.25
  %v454 = vadd.f32 %v452, %v316
  %v455 = vadd.f32 %v453, %v317
  %v456 = vsel %vm358, %v454, -inf
  %457 = vmax.xlane.f32.xlu0 %v456
  %v458 = vpop.xlane.xlu0 %457
  %v459 = vsel %vm358, %v455, -inf
  %460 = vmax.xlane.f32.xlu0 %v459
  %v461 = vpop.xlane.xlu0 %460
  %v462 = vsub.f32 %v454, %v458
  %v463 = vsub.f32 %v455, %v461
  %v464 = vmul.f32 %v462, 1.442695
  %v465 = vpow.pop %v464
  %v466 = vmul.f32 %v463, 1.442695
  %v467 = vpow.pop %v466
  %v468 = vsel %vm358, %v465, 0.0
  %469 = vadd.xlane.f32.xlu0 %v468
  %v470 = vpop.xlane.xlu0 %469
  %v471 = vsel %vm358, %v467, 0.0
  %472 = vadd.xlane.f32.xlu0 %v471
  %v473 = vpop.xlane.xlu0 %472
  %v474 = vrcp.pop %v470
  %v475 = vrcp.pop %v473
  %v476 = vmul.f32 %v465, %v474
  %v477 = vmul.f32 %v467, %v475
  %v478 = vpack.c.bf16 %v477, %v476
  %479 = vrot.lane.b32.xlu0 %v354, 48
  %v480 = vpop.permute.xlu0 %479
  %v483 = vsel %vm358, %v478, 0
  %485 = vmatpush.bf16.msra.mxu0 0
  %486 = vmatpush.bf16.msra.mxu0 0
  %487 = vmatpush.bf16.msra.mxu0 0
  %488 = vmatpush.bf16.msra.mxu0 0
  %489 = vmatpush.bf16.msra.mxu0 0
  %490 = vmatpush.bf16.msra.mxu0 0
  %491 = vmatpush.bf16.msra.mxu0 0
  %492 = vmatpush.bf16.msra.mxu0 %v480
  %493 = vmatmul.bf16.gmra.mxu0 %v483
  %v494 = vpop.f32.mrf.mxu0
  %v495 = vadd.f32 0.0, %v494
  %v496 = vpop.f32.mrf.mxu0
  %v497 = vadd.f32 0.0, %v496
  %498 = vdwg.mxu0
  %501 = vrot.lane.b32.xlu0 %v495, 16
  %v502 = vpop.permute.xlu0 %501
  %503 = vrot.lane.b32.xlu0 %v497, 16
  %v504 = vpop.permute.xlu0 %503
  %vm507 = vcmask 261248
  %508 = vst.msk [vmem:[#allocation2] sm:$0xff] %vm507, %v502
  %509 = vst.msk [vmem:[#allocation2 + $0x8] sm:$0xff] %vm507, %v504
  %v510 = vld [vmem:[#allocation2] sm:$0xff]
  %v511 = vld [vmem:[#allocation2 + $0x8] sm:$0xff]
  %v512 = vpack.c.bf16 %v511, %v510
  %v513 = vld [vmem:[%s4] sm:$0xf]
  %v514 = vld [vmem:[%s4 + $0x4] sm:$0xf]
  %v515 = vld [vmem:[%s4 + $0x8] sm:$0xf]
  %v516 = vld [vmem:[%s4 + $0xc] sm:$0xf]
  %v517 = vperm.slane %v318, 1
  %v522 = vunpack.c.l.b16 %v513
  %v523 = vunpack.c.l.b16 %v514
  %v524 = vunpack.c.l.b16 %v515
  %v525 = vunpack.c.l.b16 %v516
  %v526 = vpack.c.b16 %v523, %v522
  %v527 = vpack.c.b16 %v525, %v524
  %v531 = vsel %vm246, %v512, 0
  %533 = vmatpush.bf16.msra.mxu0 0
  %534 = vmatpush.bf16.msra.mxu0 0
  %535 = vmatpush.bf16.msra.mxu0 0
  %536 = vmatpush.bf16.msra.mxu0 0
  %537 = vmatpush.bf16.msra.mxu0 0
  %538 = vmatpush.bf16.msra.mxu0 0
  %539 = vmatpush.bf16.msra.mxu0 %v527
  %540 = vmatpush.bf16.msra.mxu0 %v526
  %541 = vmatmul.bf16.gmra.mxu0 %v531
  %v542 = vpop.f32.mrf.mxu0
  %v543 = vadd.f32 %v517, %v542
  %v544 = vpop.f32.mrf.mxu0
  %v545 = vadd.f32 %v517, %v544
  %546 = vdwg.mxu0
  %v547 = vadd.f32 %v302, %v543
  %v548 = vadd.f32 %v303, %v545
  %v549 = vsel %vm246, %v547, 0.0
  %550 = vadd.xlane.f32.xlu0 %v549
  %v551 = vpop.xlane.xlu0 %550
  %v552 = vsel %vm246, %v548, 0.0
  %553 = vadd.xlane.f32.xlu0 %v552
  %v554 = vpop.xlane.xlu0 %553
  %v555 = vmul.f32 %v551, %v259
  %v556 = vmul.f32 %v554, %v259
  %v557 = vsub.f32 %v547, %v555
  %v558 = vsub.f32 %v548, %v556
  %v559 = vmul.f32 %v557, %v557
  %v560 = vmul.f32 %v558, %v558
  %v561 = vsel %vm246, %v559, 0.0
  %562 = vadd.xlane.f32.xlu0 %v561
  %v563 = vpop.xlane.xlu0 %562
  %v564 = vsel %vm246, %v560, 0.0
  %565 = vadd.xlane.f32.xlu0 %v564
  %v566 = vpop.xlane.xlu0 %565
  %v567 = vmul.f32 %v563, %v259
  %v568 = vmul.f32 %v566, %v259
  %v569 = vadd.f32 %v567, 1e-12
  %v570 = vadd.f32 %v568, 1e-12
  %v571 = vrsqrt.pop %v569
  %v572 = vmul.f32 %v571, %v569
  %v573 = vmul.f32 %v572, %v571
  %v574 = vmul.f32 0.5, %v573
  %v575 = vsub.f32 1.5, %v574
  %v576 = vmul.f32 %v571, %v575
  %vm577 = vweird.f32 %v569
  %vm578 = vweird.f32 %v571
  %vm579 = vmor %vm577, %vm578
  %v580 = vsel %vm579, %v571, %v576
  %v581 = vrsqrt.pop %v570
  %v582 = vmul.f32 %v581, %v570
  %v583 = vmul.f32 %v582, %v581
  %v584 = vmul.f32 0.5, %v583
  %v585 = vsub.f32 1.5, %v584
  %v586 = vmul.f32 %v581, %v585
  %vm587 = vweird.f32 %v570
  %vm588 = vweird.f32 %v581
  %vm589 = vmor %vm587, %vm588
  %v590 = vsel %vm589, %v581, %v586
  %v591 = vmul.f32 %v557, %v580
  %v592 = vmul.f32 %v558, %v590
  %v593 = vperm.slane %v318, 2
  %v594 = vmul.f32 %v591, %v593
  %v595 = vmul.f32 %v592, %v593
  %v596 = vperm.slane %v318, 3
  %v597 = vadd.f32 %v594, %v596
  %v598 = vadd.f32 %v595, %v596
  %v599 = vpack.c.bf16 %v598, %v597
  %v600 = vld [vmem:[%s5] sm:$0xf]
  %v601 = vld [vmem:[%s5 + $0x4] sm:$0xf]
  %v602 = vld [vmem:[%s5 + $0x8] sm:$0xf]
  %v603 = vld [vmem:[%s5 + $0xc] sm:$0xf]
  %v604 = vperm.slane %v318, 4
  %v609 = vunpack.c.l.b16 %v600
  %v610 = vunpack.c.l.b16 %v601
  %v611 = vunpack.c.l.b16 %v602
  %v612 = vunpack.c.l.b16 %v603
  %v613 = vpack.c.b16 %v610, %v609
  %v614 = vpack.c.b16 %v612, %v611
  %v618 = vsel %vm246, %v599, 0
  %620 = vmatpush.bf16.msra.mxu0 0
  %621 = vmatpush.bf16.msra.mxu0 0
  %622 = vmatpush.bf16.msra.mxu0 0
  %623 = vmatpush.bf16.msra.mxu0 0
  %624 = vmatpush.bf16.msra.mxu0 0
  %625 = vmatpush.bf16.msra.mxu0 0
  %626 = vmatpush.bf16.msra.mxu0 %v614
  %627 = vmatpush.bf16.msra.mxu0 %v613
  %628 = vmatmul.bf16.gmra.mxu0 %v618
  %v629 = vpop.f32.mrf.mxu0
  %v630 = vadd.f32 %v604, %v629
  %v631 = vpop.f32.mrf.mxu0
  %v632 = vadd.f32 %v604, %v631
  %633 = vdwg.mxu0
  %v634 = vmul.f32 %v630, 0.5
  %v635 = vmul.f32 %v632, 0.5
  %v636 = vmul.f32 %v630, 0.044715
  %v637 = vmul.f32 %v632, 0.044715
  %v638 = vmul.f32 %v636, %v630
  %v639 = vmul.f32 %v637, %v632
  %v640 = vmul.f32 %v638, %v630
  %v641 = vmul.f32 %v639, %v632
  %v642 = vadd.f32 %v630, %v640
  %v643 = vadd.f32 %v632, %v641
  %v644 = vmul.f32 %v642, 0.7978846
  %v645 = vmul.f32 %v643, 0.7978846
  %v646 = vtanh.pop %v644
  %v647 = vtanh.pop %v645
  %v648 = vadd.f32 %v646, 1.0
  %v649 = vadd.f32 %v647, 1.0
  %v650 = vmul.f32 %v634, %v648
  %v651 = vmul.f32 %v635, %v649
  %v652 = vpack.c.bf16 %v651, %v650
  %v653 = vld [vmem:[%s6] sm:$0xf]
  %v654 = vld [vmem:[%s6 + $0x4] sm:$0xf]
  %v655 = vld [vmem:[%s6 + $0x8] sm:$0xf]
  %v656 = vld [vmem:[%s6 + $0xc] sm:$0xf]
  %v657 = vld [vmem:[%s6 + $0x10] sm:$0xf]
  %v658 = vld [vmem:[%s6 + $0x14] sm:$0xf]
  %v659 = vld [vmem:[%s6 + $0x18] sm:$0xf]
  %v660 = vld [vmem:[%s6 + $0x1c] sm:$0xf]
  %v661 = vperm.slane %v318, 5
  %v670 = vunpack.c.l.b16 %v653
  %v671 = vunpack.c.l.b16 %v654
  %v672 = vunpack.c.l.b16 %v655
  %v673 = vunpack.c.l.b16 %v656
  %v674 = vunpack.c.l.b16 %v657
  %v675 = vunpack.c.l.b16 %v658
  %v676 = vunpack.c.l.b16 %v659
  %v677 = vunpack.c.l.b16 %v660
  %v678 = vpack.c.b16 %v671, %v670
  %v679 = vpack.c.b16 %v673, %v672
  %v680 = vpack.c.b16 %v675, %v674
  %v681 = vpack.c.b16 %v677, %v676
  %vm686 = vcmask 523264
  %v688 = vsel %vm686, %v652, 0
  %690 = vmatpush.bf16.msra.mxu0 0
  %691 = vmatpush.bf16.msra.mxu0 0
  %692 = vmatpush.bf16.msra.mxu0 0
  %693 = vmatpush.bf16.msra.mxu0 0
  %694 = vmatpush.bf16.msra.mxu0 %v681
  %695 = vmatpush.bf16.msra.mxu0 %v680
  %696 = vmatpush.bf16.msra.mxu0 %v679
  %697 = vmatpush.bf16.msra.mxu0 %v678
  %698 = vmatmul.bf16.gmra.mxu0 %v688
  %v699 = vpop.f32.mrf.mxu0
  %v700 = vadd.f32 %v661, %v699
  %v701 = vpop.f32.mrf.mxu0
  %v702 = vadd.f32 %v661, %v701
  %703 = vdwg.mxu0
  %v704 = vadd.f32 %v597, %v700
  %v705 = vadd.f32 %v598, %v702
  %v706 = vsel %vm246, %v704, 0.0
  %707 = vadd.xlane.f32.xlu0 %v706
  %v708 = vpop.xlane.xlu0 %707
  %v709 = vsel %vm246, %v705, 0.0
  %710 = vadd.xlane.f32.xlu0 %v709
  %v711 = vpop.xlane.xlu0 %710
  %v712 = vmul.f32 %v708, %v259
  %v713 = vmul.f32 %v711, %v259
  %v714 = vsub.f32 %v704, %v712
  %v715 = vsub.f32 %v705, %v713
  %v716 = vmul.f32 %v714, %v714
  %v717 = vmul.f32 %v715, %v715
  %v718 = vsel %vm246, %v716, 0.0
  %719 = vadd.xlane.f32.xlu0 %v718
  %v720 = vpop.xlane.xlu0 %719
  %v721 = vsel %vm246, %v717, 0.0
  %722 = vadd.xlane.f32.xlu0 %v721
  %v723 = vpop.xlane.xlu0 %722
  %v724 = vmul.f32 %v720, %v259
  %v725 = vmul.f32 %v723, %v259
  %v726 = vadd.f32 %v724, 1e-12
  %v727 = vadd.f32 %v725, 1e-12
  %v728 = vrsqrt.pop %v726
  %v729 = vmul.f32 %v728, %v726
  %v730 = vmul.f32 %v729, %v728
  %v731 = vmul.f32 0.5, %v730
  %v732 = vsub.f32 1.5, %v731
  %v733 = vmul.f32 %v728, %v732
  %vm734 = vweird.f32 %v726
  %vm735 = vweird.f32 %v728
  %vm736 = vmor %vm734, %vm735
  %v737 = vsel %vm736, %v728, %v733
  %v738 = vrsqrt.pop %v727
  %v739 = vmul.f32 %v738, %v727
  %v740 = vmul.f32 %v739, %v738
  %v741 = vmul.f32 0.5, %v740
  %v742 = vsub.f32 1.5, %v741
  %v743 = vmul.f32 %v738, %v742
  %vm744 = vweird.f32 %v727
  %vm745 = vweird.f32 %v738
  %vm746 = vmor %vm744, %vm745
  %v747 = vsel %vm746, %v738, %v743
  %v748 = vmul.f32 %v714, %v737
  %v749 = vmul.f32 %v715, %v747
  %v750 = vperm.slane %v318, 6
  %v751 = vmul.f32 %v748, %v750
  %v752 = vmul.f32 %v749, %v750
  %v753 = vperm.slane %v318, 7
  %v754 = vadd.f32 %v751, %v753
  %v755 = vadd.f32 %v752, %v753
  %s756 = scalar_lea.vmem %s7, 8
  %v757 = vld [vmem:[%s756] sm:$0xff]
  %v758 = vpack.c.bf16 %v755, %v754
  %s759 = scalar_lea.vmem %s3, 16
  %v760 = vld [vmem:[%s759] sm:$0xf]
  %v761 = vld [vmem:[%s759 + $0x4] sm:$0xf]
  %v762 = vld [vmem:[%s759 + $0x8] sm:$0xf]
  %v763 = vld [vmem:[%s759 + $0xc] sm:$0xf]
  %v764 = vperm.slane %v757, 0
  %v769 = vunpack.c.l.b16 %v760
  %v770 = vunpack.c.l.b16 %v761
  %v771 = vunpack.c.l.b16 %v762
  %v772 = vunpack.c.l.b16 %v763
  %v773 = vpack.c.b16 %v770, %v769
  %v774 = vpack.c.b16 %v772, %v771
  %v778 = vsel %vm246, %v758, 0
  %780 = vmatpush.bf16.msra.mxu0 0
  %781 = vmatpush.bf16.msra.mxu0 0
  %782 = vmatpush.bf16.msra.mxu0 0
  %783 = vmatpush.bf16.msra.mxu0 0
  %784 = vmatpush.bf16.msra.mxu0 0
  %785 = vmatpush.bf16.msra.mxu0 0
  %786 = vmatpush.bf16.msra.mxu0 %v774
  %787 = vmatpush.bf16.msra.mxu0 %v773
  %788 = vmatmul.bf16.gmra.mxu0 %v778
  %v789 = vpop.f32.mrf.mxu0
  %v790 = vadd.f32 %v764, %v789
  %v791 = vpop.f32.mrf.mxu0
  %v792 = vadd.f32 %v764, %v791
  %793 = vdwg.mxu0
  %v794 = vpack.c.bf16 %v792, %v790
  %796 = vrot.lane.b32.xlu0 %v794, 112
  %v797 = vpop.permute.xlu0 %796
  %v799 = vsel %vm358, %v794, 0
  %v802 = vsel %vm358, %v797, 0
  %804 = vmatpush.bf16.xpose.msra.mxu0 0
  %805 = vmatpush.bf16.xpose.msra.mxu0 0
  %806 = vmatpush.bf16.xpose.msra.mxu0 0
  %807 = vmatpush.bf16.xpose.msra.mxu0 0
  %808 = vmatpush.bf16.xpose.msra.mxu0 0
  %809 = vmatpush.bf16.xpose.msra.mxu0 0
  %810 = vmatpush.bf16.xpose.msra.mxu0 0
  %811 = vmatpush.bf16.xpose.msra.mxu0 %v802
  %812 = vmatmul.bf16.gmra.mxu0 %v799
  %v813 = vpop.f32.mrf.mxu0
  %v814 = vadd.f32 0.0, %v813
  %v815 = vpop.f32.mrf.mxu0
  %v816 = vadd.f32 0.0, %v815
  %817 = vdwg.mxu0
  %v818 = vmul.f32 %v814, 0.25
  %v819 = vmul.f32 %v816, 0.25
  %v820 = vadd.f32 %v818, %v316
  %v821 = vadd.f32 %v819, %v317
  %v822 = vsel %vm358, %v820, -inf
  %823 = vmax.xlane.f32.xlu0 %v822
  %v824 = vpop.xlane.xlu0 %823
  %v825 = vsel %vm358, %v821, -inf
  %826 = vmax.xlane.f32.xlu0 %v825
  %v827 = vpop.xlane.xlu0 %826
  %v828 = vsub.f32 %v820, %v824
  %v829 = vsub.f32 %v821, %v827
  %v830 = vmul.f32 %v828, 1.442695
  %v831 = vpow.pop %v830
  %v832 = vmul.f32 %v829, 1.442695
  %v833 = vpow.pop %v832
  %v834 = vsel %vm358, %v831, 0.0
  %835 = vadd.xlane.f32.xlu0 %v834
  %v836 = vpop.xlane.xlu0 %835
  %v837 = vsel %vm358, %v833, 0.0
  %838 = vadd.xlane.f32.xlu0 %v837
  %v839 = vpop.xlane.xlu0 %838
  %v840 = vrcp.pop %v836
  %v841 = vrcp.pop %v839
  %v842 = vmul.f32 %v831, %v840
  %v843 = vmul.f32 %v833, %v841
  %v844 = vpack.c.bf16 %v843, %v842
  %845 = vrot.lane.b32.xlu0 %v794, 96
  %v846 = vpop.permute.xlu0 %845
  %v849 = vsel %vm358, %v844, 0
  %851 = vmatpush.bf16.msra.mxu0 0
  %852 = vmatpush.bf16.msra.mxu0 0
  %853 = vmatpush.bf16.msra.mxu0 0
  %854 = vmatpush.bf16.msra.mxu0 0
  %855 = vmatpush.bf16.msra.mxu0 0
  %856 = vmatpush.bf16.msra.mxu0 0
  %857 = vmatpush.bf16.msra.mxu0 0
  %858 = vmatpush.bf16.msra.mxu0 %v846
  %859 = vmatmul.bf16.gmra.mxu0 %v849
  %v860 = vpop.f32.mrf.mxu0
  %v861 = vadd.f32 0.0, %v860
  %v862 = vpop.f32.mrf.mxu0
  %v863 = vadd.f32 0.0, %v862
  %864 = vdwg.mxu0
  %865 = vst.msk [vmem:[#allocation2] sm:$0xff] %vm358, %v861
  %866 = vst.msk [vmem:[#allocation2 + $0x8] sm:$0xff] %vm358, %v863
  %867 = vrot.lane.b32.xlu0 %v794, 80
  %v868 = vpop.permute.xlu0 %867
  %869 = vrot.lane.b32.xlu0 %v794, 64
  %v870 = vpop.permute.xlu0 %869
  %v872 = vsel %vm358, %v868, 0
  %v875 = vsel %vm358, %v870, 0
  %877 = vmatpush.bf16.xpose.msra.mxu0 0
  %878 = vmatpush.bf16.xpose.msra.mxu0 0
  %879 = vmatpush.bf16.xpose.msra.mxu0 0
  %880 = vmatpush.bf16.xpose.msra.mxu0 0
  %881 = vmatpush.bf16.xpose.msra.mxu0 0
  %882 = vmatpush.bf16.xpose.msra.mxu0 0
  %883 = vmatpush.bf16.xpose.msra.mxu0 0
  %884 = vmatpush.bf16.xpose.msra.mxu0 %v875
  %885 = vmatmul.bf16.gmra.mxu0 %v872
  %v886 = vpop.f32.mrf.mxu0
  %v887 = vadd.f32 0.0, %v886
  %v888 = vpop.f32.mrf.mxu0
  %v889 = vadd.f32 0.0, %v888
  %890 = vdwg.mxu0
  %v891 = vmul.f32 %v887, 0.25
  %v892 = vmul.f32 %v889, 0.25
  %v893 = vadd.f32 %v891, %v316
  %v894 = vadd.f32 %v892, %v317
  %v895 = vsel %vm358, %v893, -inf
  %896 = vmax.xlane.f32.xlu0 %v895
  %v897 = vpop.xlane.xlu0 %896
  %v898 = vsel %vm358, %v894, -inf
  %899 = vmax.xlane.f32.xlu0 %v898
  %v900 = vpop.xlane.xlu0 %899
  %v901 = vsub.f32 %v893, %v897
  %v902 = vsub.f32 %v894, %v900
  %v903 = vmul.f32 %v901, 1.442695
  %v904 = vpow.pop %v903
  %v905 = vmul.f32 %v902, 1.442695
  %v906 = vpow.pop %v905
  %v907 = vsel %vm358, %v904, 0.0
  %908 = vadd.xlane.f32.xlu0 %v907
  %v909 = vpop.xlane.xlu0 %908
  %v910 = vsel %vm358, %v906, 0.0
  %911 = vadd.xlane.f32.xlu0 %v910
  %v912 = vpop.xlane.xlu0 %911
  %v913 = vrcp.pop %v909
  %v914 = vrcp.pop %v912
  %v915 = vmul.f32 %v904, %v913
  %v916 = vmul.f32 %v906, %v914
  %v917 = vpack.c.bf16 %v916, %v915
  %918 = vrot.lane.b32.xlu0 %v794, 48
  %v919 = vpop.permute.xlu0 %918
  %v922 = vsel %vm358, %v917, 0
  %924 = vmatpush.bf16.msra.mxu0 0
  %925 = vmatpush.bf16.msra.mxu0 0
  %926 = vmatpush.bf16.msra.mxu0 0
  %927 = vmatpush.bf16.msra.mxu0 0
  %928 = vmatpush.bf16.msra.mxu0 0
  %929 = vmatpush.bf16.msra.mxu0 0
  %930 = vmatpush.bf16.msra.mxu0 0
  %931 = vmatpush.bf16.msra.mxu0 %v919
  %932 = vmatmul.bf16.gmra.mxu0 %v922
  %v933 = vpop.f32.mrf.mxu0
  %v934 = vadd.f32 0.0, %v933
  %v935 = vpop.f32.mrf.mxu0
  %v936 = vadd.f32 0.0, %v935
  %937 = vdwg.mxu0
  %940 = vrot.lane.b32.xlu0 %v934, 16
  %v941 = vpop.permute.xlu0 %940
  %942 = vrot.lane.b32.xlu0 %v936, 16
  %v943 = vpop.permute.xlu0 %942
  %946 = vst.msk [vmem:[#allocation2] sm:$0xff] %vm507, %v941
  %947 = vst.msk [vmem:[#allocation2 + $0x8] sm:$0xff] %vm507, %v943
  %v948 = vld [vmem:[#allocation2] sm:$0xff]
  %v949 = vld [vmem:[#allocation2 + $0x8] sm:$0xff]
  %v950 = vpack.c.bf16 %v949, %v948
  %s951 = scalar_lea.vmem %s4, 16
  %v952 = vld [vmem:[%s951] sm:$0xf]
  %v953 = vld [vmem:[%s951 + $0x4] sm:$0xf]
  %v954 = vld [vmem:[%s951 + $0x8] sm:$0xf]
  %v955 = vld [vmem:[%s951 + $0xc] sm:$0xf]
  %v956 = vperm.slane %v757, 1
  %v961 = vunpack.c.l.b16 %v952
  %v962 = vunpack.c.l.b16 %v953
  %v963 = vunpack.c.l.b16 %v954
  %v964 = vunpack.c.l.b16 %v955
  %v965 = vpack.c.b16 %v962, %v961
  %v966 = vpack.c.b16 %v964, %v963
  %v970 = vsel %vm246, %v950, 0
  %972 = vmatpush.bf16.msra.mxu0 0
  %973 = vmatpush.bf16.msra.mxu0 0
  %974 = vmatpush.bf16.msra.mxu0 0
  %975 = vmatpush.bf16.msra.mxu0 0
  %976 = vmatpush.bf16.msra.mxu0 0
  %977 = vmatpush.bf16.msra.mxu0 0
  %978 = vmatpush.bf16.msra.mxu0 %v966
  %979 = vmatpush.bf16.msra.mxu0 %v965
  %980 = vmatmul.bf16.gmra.mxu0 %v970
  %v981 = vpop.f32.mrf.mxu0
  %v982 = vadd.f32 %v956, %v981
  %v983 = vpop.f32.mrf.mxu0
  %v984 = vadd.f32 %v956, %v983
  %985 = vdwg.mxu0
  %v986 = vadd.f32 %v754, %v982
  %v987 = vadd.f32 %v755, %v984
  %v988 = vsel %vm246, %v986, 0.0
  %989 = vadd.xlane.f32.xlu0 %v988
  %v990 = vpop.xlane.xlu0 %989
  %v991 = vsel %vm246, %v987, 0.0
  %992 = vadd.xlane.f32.xlu0 %v991
  %v993 = vpop.xlane.xlu0 %992
  %v994 = vmul.f32 %v990, %v259
  %v995 = vmul.f32 %v993, %v259
  %v996 = vsub.f32 %v986, %v994
  %v997 = vsub.f32 %v987, %v995
  %v998 = vmul.f32 %v996, %v996
  %v999 = vmul.f32 %v997, %v997
  %v1000 = vsel %vm246, %v998, 0.0
  %1001 = vadd.xlane.f32.xlu0 %v1000
  %v1002 = vpop.xlane.xlu0 %1001
  %v1003 = vsel %vm246, %v999, 0.0
  %1004 = vadd.xlane.f32.xlu0 %v1003
  %v1005 = vpop.xlane.xlu0 %1004
  %v1006 = vmul.f32 %v1002, %v259
  %v1007 = vmul.f32 %v1005, %v259
  %v1008 = vadd.f32 %v1006, 1e-12
  %v1009 = vadd.f32 %v1007, 1e-12
  %v1010 = vrsqrt.pop %v1008
  %v1011 = vmul.f32 %v1010, %v1008
  %v1012 = vmul.f32 %v1011, %v1010
  %v1013 = vmul.f32 0.5, %v1012
  %v1014 = vsub.f32 1.5, %v1013
  %v1015 = vmul.f32 %v1010, %v1014
  %vm1016 = vweird.f32 %v1008
  %vm1017 = vweird.f32 %v1010
  %vm1018 = vmor %vm1016, %vm1017
  %v1019 = vsel %vm1018, %v1010, %v1015
  %v1020 = vrsqrt.pop %v1009
  %v1021 = vmul.f32 %v1020, %v1009
  %v1022 = vmul.f32 %v1021, %v1020
  %v1023 = vmul.f32 0.5, %v1022
  %v1024 = vsub.f32 1.5, %v1023
  %v1025 = vmul.f32 %v1020, %v1024
  %vm1026 = vweird.f32 %v1009
  %vm1027 = vweird.f32 %v1020
  %vm1028 = vmor %vm1026, %vm1027
  %v1029 = vsel %vm1028, %v1020, %v1025
  %v1030 = vmul.f32 %v996, %v1019
  %v1031 = vmul.f32 %v997, %v1029
  %v1032 = vperm.slane %v757, 2
  %v1033 = vmul.f32 %v1030, %v1032
  %v1034 = vmul.f32 %v1031, %v1032
  %v1035 = vperm.slane %v757, 3
  %v1036 = vadd.f32 %v1033, %v1035
  %v1037 = vadd.f32 %v1034, %v1035
  %v1038 = vpack.c.bf16 %v1037, %v1036
  %s1039 = scalar_lea.vmem %s5, 16
  %v1040 = vld [vmem:[%s1039] sm:$0xf]
  %v1041 = vld [vmem:[%s1039 + $0x4] sm:$0xf]
  %v1042 = vld [vmem:[%s1039 + $0x8] sm:$0xf]
  %v1043 = vld [vmem:[%s1039 + $0xc] sm:$0xf]
  %v1044 = vperm.slane %v757, 4
  %v1049 = vunpack.c.l.b16 %v1040
  %v1050 = vunpack.c.l.b16 %v1041
  %v1051 = vunpack.c.l.b16 %v1042
  %v1052 = vunpack.c.l.b16 %v1043
  %v1053 = vpack.c.b16 %v1050, %v1049
  %v1054 = vpack.c.b16 %v1052, %v1051
  %v1058 = vsel %vm246, %v1038, 0
  %1060 = vmatpush.bf16.msra.mxu0 0
  %1061 = vmatpush.bf16.msra.mxu0 0
  %1062 = vmatpush.bf16.msra.mxu0 0
  %1063 = vmatpush.bf16.msra.mxu0 0
  %1064 = vmatpush.bf16.msra.mxu0 0
  %1065 = vmatpush.bf16.msra.mxu0 0
  %1066 = vmatpush.bf16.msra.mxu0 %v1054
  %1067 = vmatpush.bf16.msra.mxu0 %v1053
  %1068 = vmatmul.bf16.gmra.mxu0 %v1058
  %v1069 = vpop.f32.mrf.mxu0
  %v1070 = vadd.f32 %v1044, %v1069
  %v1071 = vpop.f32.mrf.mxu0
  %v1072 = vadd.f32 %v1044, %v1071
  %1073 = vdwg.mxu0
  %v1074 = vmul.f32 %v1070, 0.5
  %v1075 = vmul.f32 %v1072, 0.5
  %v1076 = vmul.f32 %v1070, 0.044715
  %v1077 = vmul.f32 %v1072, 0.044715
  %v1078 = vmul.f32 %v1076, %v1070
  %v1079 = vmul.f32 %v1077, %v1072
  %v1080 = vmul.f32 %v1078, %v1070
  %v1081 = vmul.f32 %v1079, %v1072
  %v1082 = vadd.f32 %v1070, %v1080
  %v1083 = vadd.f32 %v1072, %v1081
  %v1084 = vmul.f32 %v1082, 0.7978846
  %v1085 = vmul.f32 %v1083, 0.7978846
  %v1086 = vtanh.pop %v1084
  %v1087 = vtanh.pop %v1085
  %v1088 = vadd.f32 %v1086, 1.0
  %v1089 = vadd.f32 %v1087, 1.0
  %v1090 = vmul.f32 %v1074, %v1088
  %v1091 = vmul.f32 %v1075, %v1089
  %v1092 = vpack.c.bf16 %v1091, %v1090
  %s1093 = scalar_lea.vmem %s6, 32
  %v1094 = vld [vmem:[%s1093] sm:$0xf]
  %v1095 = vld [vmem:[%s1093 + $0x4] sm:$0xf]
  %v1096 = vld [vmem:[%s1093 + $0x8] sm:$0xf]
  %v1097 = vld [vmem:[%s1093 + $0xc] sm:$0xf]
  %v1098 = vld [vmem:[%s1093 + $0x10] sm:$0xf]
  %v1099 = vld [vmem:[%s1093 + $0x14] sm:$0xf]
  %v1100 = vld [vmem:[%s1093 + $0x18] sm:$0xf]
  %v1101 = vld [vmem:[%s1093 + $0x1c] sm:$0xf]
  %v1102 = vperm.slane %v757, 5
  %v1111 = vunpack.c.l.b16 %v1094
  %v1112 = vunpack.c.l.b16 %v1095
  %v1113 = vunpack.c.l.b16 %v1096
  %v1114 = vunpack.c.l.b16 %v1097
  %v1115 = vunpack.c.l.b16 %v1098
  %v1116 = vunpack.c.l.b16 %v1099
  %v1117 = vunpack.c.l.b16 %v1100
  %v1118 = vunpack.c.l.b16 %v1101
  %v1119 = vpack.c.b16 %v1112, %v1111
  %v1120 = vpack.c.b16 %v1114, %v1113
  %v1121 = vpack.c.b16 %v1116, %v1115
  %v1122 = vpack.c.b16 %v1118, %v1117
  %v1128 = vsel %vm686, %v1092, 0
  %1130 = vmatpush.bf16.msra.mxu0 0
  %1131 = vmatpush.bf16.msra.mxu0 0
  %1132 = vmatpush.bf16.msra.mxu0 0
  %1133 = vmatpush.bf16.msra.mxu0 0
  %1134 = vmatpush.bf16.msra.mxu0 %v1122
  %1135 = vmatpush.bf16.msra.mxu0 %v1121
  %1136 = vmatpush.bf16.msra.mxu0 %v1120
  %1137 = vmatpush.bf16.msra.mxu0 %v1119
  %1138 = vmatmul.bf16.gmra.mxu0 %v1128
  %v1139 = vpop.f32.mrf.mxu0
  %v1140 = vadd.f32 %v1102, %v1139
  %v1141 = vpop.f32.mrf.mxu0
  %v1142 = vadd.f32 %v1102, %v1141
  %1143 = vdwg.mxu0
  %v1144 = vadd.f32 %v1036, %v1140
  %v1145 = vadd.f32 %v1037, %v1142
  %v1146 = vsel %vm246, %v1144, 0.0
  %1147 = vadd.xlane.f32.xlu0 %v1146
  %v1148 = vpop.xlane.xlu0 %1147
  %v1149 = vsel %vm246, %v1145, 0.0
  %1150 = vadd.xlane.f32.xlu0 %v1149
  %v1151 = vpop.xlane.xlu0 %1150
  %v1152 = vmul.f32 %v1148, %v259
  %v1153 = vmul.f32 %v1151, %v259
  %v1154 = vsub.f32 %v1144, %v1152
  %v1155 = vsub.f32 %v1145, %v1153
  %v1156 = vmul.f32 %v1154, %v1154
  %v1157 = vmul.f32 %v1155, %v1155
  %v1158 = vsel %vm246, %v1156, 0.0
  %1159 = vadd.xlane.f32.xlu0 %v1158
  %v1160 = vpop.xlane.xlu0 %1159
  %v1161 = vsel %vm246, %v1157, 0.0
  %1162 = vadd.xlane.f32.xlu0 %v1161
  %v1163 = vpop.xlane.xlu0 %1162
  %v1164 = vmul.f32 %v1160, %v259
  %v1165 = vmul.f32 %v1163, %v259
  %v1166 = vadd.f32 %v1164, 1e-12
  %v1167 = vadd.f32 %v1165, 1e-12
  %v1168 = vrsqrt.pop %v1166
  %v1169 = vmul.f32 %v1168, %v1166
  %v1170 = vmul.f32 %v1169, %v1168
  %v1171 = vmul.f32 0.5, %v1170
  %v1172 = vsub.f32 1.5, %v1171
  %v1173 = vmul.f32 %v1168, %v1172
  %vm1174 = vweird.f32 %v1166
  %vm1175 = vweird.f32 %v1168
  %vm1176 = vmor %vm1174, %vm1175
  %v1177 = vsel %vm1176, %v1168, %v1173
  %v1178 = vrsqrt.pop %v1167
  %v1179 = vmul.f32 %v1178, %v1167
  %v1180 = vmul.f32 %v1179, %v1178
  %v1181 = vmul.f32 0.5, %v1180
  %v1182 = vsub.f32 1.5, %v1181
  %v1183 = vmul.f32 %v1178, %v1182
  %vm1184 = vweird.f32 %v1167
  %vm1185 = vweird.f32 %v1178
  %vm1186 = vmor %vm1184, %vm1185
  %v1187 = vsel %vm1186, %v1178, %v1183
  %v1188 = vmul.f32 %v1154, %v1177
  %v1189 = vmul.f32 %v1155, %v1187
  %v1190 = vperm.slane %v757, 6
  %v1191 = vmul.f32 %v1188, %v1190
  %v1192 = vmul.f32 %v1189, %v1190
  %v1193 = vperm.slane %v757, 7
  %v1194 = vadd.f32 %v1191, %v1193
  %v1195 = vadd.f32 %v1192, %v1193
  %v1196 = vpack.c.bf16 %v1195, %v1194
  %v1197 = vld [vmem:[%s8] sm:$0xf]
  %v1198 = vld [vmem:[%s8 + $0x4] sm:$0xf]
  %v1199 = vld [vmem:[%s8 + $0x8] sm:$0xf]
  %v1200 = vld [vmem:[%s8 + $0xc] sm:$0xf]
  %v1201 = vperm.slane %v245, 2
  %v1206 = vunpack.c.l.b16 %v1197
  %v1207 = vunpack.c.l.b16 %v1198
  %v1208 = vunpack.c.l.b16 %v1199
  %v1209 = vunpack.c.l.b16 %v1200
  %v1210 = vpack.c.b16 %v1207, %v1206
  %v1211 = vpack.c.b16 %v1209, %v1208
  %v1215 = vsel %vm246, %v1196, 0
  %1217 = vmatpush.bf16.msra.mxu0 0
  %1218 = vmatpush.bf16.msra.mxu0 0
  %1219 = vmatpush.bf16.msra.mxu0 0
  %1220 = vmatpush.bf16.msra.mxu0 0
  %1221 = vmatpush.bf16.msra.mxu0 0
  %1222 = vmatpush.bf16.msra.mxu0 0
  %1223 = vmatpush.bf16.msra.mxu0 %v1211
  %1224 = vmatpush.bf16.msra.mxu0 %v1210
  %1225 = vmatmul.bf16.gmra.mxu0 %v1215
  %v1226 = vpop.f32.mrf.mxu0
  %v1227 = vadd.f32 %v1201, %v1226
  %v1228 = vpop.f32.mrf.mxu0
  %v1229 = vadd.f32 %v1201, %v1228
  %1230 = vdwg.mxu0
  %v1231 = vtanh.pop %v1227
  %v1232 = vtanh.pop %v1229
  %v1233 = vpack.c.bf16 %v1232, %v1231
  %v1234 = vld [vmem:[%s9] sm:$0xf]
  %v1235 = vld [vmem:[%s9 + $0x4] sm:$0xf]
  %v1236 = vld [vmem:[%s9 + $0x8] sm:$0xf]
  %v1237 = vld [vmem:[%s9 + $0xc] sm:$0xf]
  %v1238 = vperm.slane %v245, 3
  %v1243 = vunpack.c.l.b16 %v1234
  %v1244 = vunpack.c.l.b16 %v1235
  %v1245 = vunpack.c.l.b16 %v1236
  %v1246 = vunpack.c.l.b16 %v1237
  %v1247 = vpack.c.b16 %v1244, %v1243
  %v1248 = vpack.c.b16 %v1246, %v1245
  %v1252 = vsel %vm246, %v1233, 0
  %1254 = vmatpush.bf16.msra.mxu0 0
  %1255 = vmatpush.bf16.msra.mxu0 0
  %1256 = vmatpush.bf16.msra.mxu0 0
  %1257 = vmatpush.bf16.msra.mxu0 0
  %1258 = vmatpush.bf16.msra.mxu0 0
  %1259 = vmatpush.bf16.msra.mxu0 0
  %1260 = vmatpush.bf16.msra.mxu0 %v1248
  %1261 = vmatpush.bf16.msra.mxu0 %v1247
  %1262 = vmatmul.bf16.gmra.mxu0 %v1252
  %v1263 = vpop.f32.mrf.mxu0
  %v1264 = vadd.f32 %v1238, %v1263
  %v1265 = vpop.f32.mrf.mxu0
  %v1266 = vadd.f32 %v1238, %v1265
  %1267 = vdwg.mxu0
  %1268 = vst [vmem:[%s10] sm:$0xff] %v1264
  %1269 = vst [vmem:[%s10 + $0x8] sm:$0xff] %v1266
  // Predicated region
  $region42: #{bert_classifier_forward.1} parent=0 // pred_check
    _
  $region43: #{bert_classifier_forward.1} parent=0 // pred_check_branch
    %1271 = sbr.rel (0) target = $region45
  $region44: #{bert_classifier_forward.1} parent=0 // pred_region
    _
  $region45: #{bert_classifier_forward.1} parent=0 // pred_fallthru
    _
  // Predicated region
  $region46: #{bert_classifier_forward.1} parent=0 // pred_check
    _
  $region47: #{bert_classifier_forward.1} parent=0 // pred_check_branch
    %1273 = sbr.rel (0) target = $region49
  $region48: #{bert_classifier_forward.1} parent=0 // pred_region
    _
  $region49: #{bert_classifier_forward.1} parent=0 // pred_fallthru
    _

</llo_original>
